<compile_context>
chip_gen: v6e
topology: v6e:2x2x1
jax: 0.10.0
libtpu: 0.0.40
codegen_flags: <defaults>
</compile_context>

<pallas_src>
import numpy as np
import jax
import jax.numpy as jnp
from jax.experimental import pallas as pl
from jax.experimental.pallas import tpu as pltpu


# ----------------------------- configuration -----------------------------
WINDOW = 8                              # window_size -> N = 64 tokens
N_TOK = WINDOW * WINDOW
DIM = 32                                # input channels C
NUM_HEADS = 4
HEAD_DIM = DIM // NUM_HEADS             # attn_head_dim = None -> dim // num_heads
ALL_HEAD_DIM = NUM_HEADS * HEAD_DIM
OUT_DIM = 32
SCALE = HEAD_DIM ** (-0.5)              # qk_scale = None
BATCH = 2
LANES = 128                             # lane-dense output width
MASK_NEG = -1e30                        # additive mask bias (exp() underflows to 0)
# NOTE: every row of the 3x3 local mask always has >= 1 allowed entry (the
# token itself), so the additive -1e30 bias is exactly equivalent to the
# reference's masked_fill + softmax.  An all-masked row would diverge.


def build_local_mask(window_size: int, kernel_size: int = 3) -> np.ndarray:
    """Same construction as the PyTorch __init__: 1 = masked out, 0 = allowed."""
    n = window_size * window_size
    mask = np.ones((n, n), dtype=np.float32)
    for i in range(window_size):
        for j in range(window_size):
            cur = np.ones((window_size, window_size), dtype=np.float32)
            stx, sty = max(i - kernel_size // 2, 0), max(j - kernel_size // 2, 0)
            edx = min(i + kernel_size // 2, window_size - 1)
            edy = min(j + kernel_size // 2, window_size - 1)
            cur[stx:edx + 1, sty:edy + 1] = 0.0
            mask[i * window_size + j] = cur.flatten()
    return mask


# ------------------------- host-side parameter prep -----------------------
def prepare_params(w_qkv, w_proj, b_proj):
    """PyTorch-layout weights -> fused kernel layout (one-time transform).

    w_qkv:  (3*A, C)   nn.Linear(dim, 3*A, bias=False).weight
    w_proj: (OUT, A)   nn.Linear(A, out_dim).weight
    b_proj: (OUT,)     nn.Linear(A, out_dim).bias

    Returns:
      w_qkv_fused: (C, 3*A)   columns ordered [Q | K | V], each block
                              (head-major, dim-minor); SCALE folded into Q.
      wpb:         (A+1, 128) rows 0..A-1 = proj.weight.T zero-padded to 128
                              lanes, row A = proj bias (padded).  Padding to
                              128 lanes makes the kernel's output store
                              lane-dense (unmasked vst) with no relayout.
    """
    A = ALL_HEAD_DIM
    wq_f = w_qkv[:A].T * SCALE                       # (C, A)
    wkv_f = w_qkv[A:].T                              # (C, 2A)
    w_qkv_fused = jnp.concatenate([wq_f, wkv_f], axis=1)       # (C, 3A)

    out_dim = w_proj.shape[0]
    pad = LANES - out_dim
    wp_pad = jnp.pad(w_proj.T, ((0, 0), (0, pad)))             # (A, 128)
    bp_pad = jnp.pad(b_proj.reshape(1, out_dim), ((0, 0), (0, pad)))  # (1, 128)
    wpb = jnp.concatenate([wp_pad, bp_pad], axis=0)            # (A+1, 128)
    return w_qkv_fused, wpb


def build_block_bias(local_bias_np: np.ndarray, block_b: int) -> jnp.ndarray:
    """Block-diagonal additive bias for `block_b` windows folded into rows.

    Diagonal blocks carry the local-window mask bias; off-diagonal blocks are
    fully masked (-1e30) so cross-window scores contribute exactly 0 to the
    softmax (identical result to per-window attention).
    """
    n = local_bias_np.shape[0]
    r = block_b * n
    bias = np.full((r, r), MASK_NEG, dtype=np.float32)
    for i in range(block_b):
        bias[i * n:(i + 1) * n, i * n:(i + 1) * n] = local_bias_np
    return jnp.asarray(bias)


# ------------------------------- the kernel -------------------------------
def local_attn_kernel(x_ref, wqkv_ref, bias_ref, wpb_ref, o_ref):
    # x_ref:    (BT, N, C)      BT windows per grid step
    # wqkv_ref: (C, 3A)         fused QKV weight, SCALE folded into Q columns
    # bias_ref: (R, R)          block-diagonal additive mask bias, R = BT*N
    # wpb_ref:  (A+1, 128)      proj weight (zero-padded lanes) + bias row
    # o_ref:    (R, 128)        lane-dense output slab (first OUT lanes valid)
    bt, n, c = x_ref.shape
    a3 = wqkv_ref.shape[1]
    a = a3 // 3
    hd = a // NUM_HEADS
    r = bt * n

    # --- fused QKV projection: ONE 2-D matmul (M=r, K=C, N=3A) ------------
    x2 = x_ref[...].reshape(r, c)                               # leading-dim merge
    qkv = jnp.dot(x2, wqkv_ref[...],
                  preferred_element_type=jnp.float32)           # (r, 3A)

    # --- head-batched views via cheap static lane slices (no broadcasts) --
    def split_heads(base):
        return jnp.stack(
            [qkv[:, base + h * hd: base + (h + 1) * hd] for h in range(NUM_HEADS)],
            axis=0)                                             # (H, r, hd)

    q = split_heads(0)
    k = split_heads(a)
    v = split_heads(2 * a)

    # --- attention scores + block-diagonal local-window mask --------------
    s = jnp.einsum('hqd,hkd->hqk', q, k,
                   preferred_element_type=jnp.float32)          # (H, r, r)
    s = s + bias_ref[...][None, :, :]

    # --- explicit f32 softmax (attn_drop == identity) ----------------------
    m = jnp.max(s, axis=-1, keepdims=True)                      # XLU reduce
    e = jnp.exp(s - m)                                          # EUP
    l = jnp.sum(e, axis=-1, keepdims=True)                      # XLU reduce
    p = e * pl.reciprocal(l, approx=False)                      # EUP recip + VPU mul

    av = jnp.einsum('hqk,hkd->hqd', p, v,
                    preferred_element_type=jnp.float32)         # (H, r, hd)

    # --- output projection: single matmul with contraction dim A=32 --------
    # (equivalent to contracting over (h, d) jointly; heads lane-concatenated
    #  to match the PyTorch transpose(1,2).reshape ordering)
    av2 = jnp.concatenate([av[h] for h in range(NUM_HEADS)], axis=-1)   # (r, A)
    w = wpb_ref[...]
    out = jnp.dot(av2, w[:a, :],
                  preferred_element_type=jnp.float32) + w[a:a + 1, :]   # (r, 128)

    # Lane-dense, unmasked store (128 lanes; lanes >= OUT are exact zeros).
    o_ref[...] = out.astype(o_ref.dtype)


# ------------------------------- wrapper -----------------------------------
def local_attention_head(x, w_qkv_fused, local_bias_np, wpb, *,
                         block_b=None, out_dim=OUT_DIM):
    """x: (B, N, C).  Returns (B, N, out_dim).

    block_b = None -> fold all windows into one grid step (best on the
    single-TensorCore v5e/v6e).  On v7x pass block_b=1 so the 2-point
    "parallel" grid can land on both TensorCores.
    """
    B, N, C = x.shape
    if block_b is None:
        block_b = B
    assert B % block_b == 0, "block_b must divide the batch"
    a3 = w_qkv_fused.shape[1]
    A = a3 // 3
    R = block_b * N
    grid = (B // block_b,)

    bias = build_block_bias(local_bias_np, block_b)             # (R, R)

    # Advisory cost hint for XLA scheduling around this short custom call.
    steps = B // block_b
    flops = steps * (2 * R * C * a3                      # fused qkv projection
                     + 2 * NUM_HEADS * R * R * HEAD_DIM * 2   # q@k^T and attn@v
                     + 2 * R * A * LANES)                # output projection
    transcendentals = steps * NUM_HEADS * R * R
    bytes_accessed = 4 * (x.size + w_qkv_fused.size + steps * bias.size
                          + wpb.size + B * N * LANES)

    y = pl.pallas_call(
        local_attn_kernel,
        out_shape=jax.ShapeDtypeStruct((B * N, LANES), jnp.float32),
        grid_spec=pltpu.PrefetchScalarGridSpec(
            num_scalar_prefetch=0,
            grid=grid,
            in_specs=[
                pl.BlockSpec((block_b, N, C), lambda b: (b, 0, 0)),
                pl.BlockSpec((C, a3), lambda b: (0, 0)),
                pl.BlockSpec((R, R), lambda b: (0, 0)),
                pl.BlockSpec((A + 1, LANES), lambda b: (0, 0)),
                # NOTE: with block_b < B one could add
                # pipeline_mode=pl.Buffered(1) to the three constant-index
                # operands to skip their second pipeline buffer; with the
                # default single-step grid it would be a no-op.
            ],
            out_specs=pl.BlockSpec((R, LANES), lambda b: (b, 0)),
        ),
        compiler_params=pltpu.CompilerParams(
            dimension_semantics=("parallel",)),
        cost_estimate=pl.CostEstimate(
            flops=int(flops),
            transcendentals=int(transcendentals),
            bytes_accessed=int(bytes_accessed)),
    )(x, w_qkv_fused, bias, wpb)

    # Drop the zero-padded lanes and restore the (B, N, OUT) logical shape.
    return y[:, :out_dim].reshape(B, N, out_dim)


# --------------------------- pure-JAX reference ---------------------------
def reference(x, w_qkv, w_proj, b_proj, mask):
    """Faithful port of the PyTorch forward (PyTorch weight layouts)."""
    B, N, C = x.shape
    qkv = x @ w_qkv.T                                          # (B, N, 3A)
    qkv = qkv.reshape(B, N, 3, NUM_HEADS, HEAD_DIM).transpose(2, 0, 3, 1, 4)
    q, k, v = qkv[0] * SCALE, qkv[1], qkv[2]                   # (B, H, N, hd)
    attn = jnp.einsum('bhqd,bhkd->bhqk', q, k)
    neg_val = -jnp.finfo(attn.dtype).max                       # max_neg_value(attn)
    attn = jnp.where(mask[None, None] > 0.5, neg_val, attn)
    attn = jax.nn.softmax(attn, axis=-1)
    out = jnp.einsum('bhqk,bhkd->bhqd', attn, v)
    out = out.transpose(0, 2, 1, 3).reshape(B, N, ALL_HEAD_DIM)
    return out @ w_proj.T + b_proj


# --------------------------------- main -----------------------------------
if __name__ == "__main__":
    key = jax.random.PRNGKey(0)
    k_x, k_qkv, k_proj, k_bias = jax.random.split(key, 4)

    x = jax.random.normal(k_x, (BATCH, N_TOK, DIM), dtype=jnp.float32)

    # Synthetic parameters in native PyTorch layout:
    #   qkv.weight (3A, C), proj.weight (OUT, A), proj.bias (OUT,)
    w_qkv = 0.02 * jax.random.normal(k_qkv, (3 * ALL_HEAD_DIM, DIM), jnp.float32)
    w_proj = 0.02 * jax.random.normal(k_proj, (OUT_DIM, ALL_HEAD_DIM), jnp.float32)
    b_proj = 0.02 * jax.random.normal(k_bias, (OUT_DIM,), jnp.float32)

    mask_np = build_local_mask(WINDOW, kernel_size=3)
    local_bias_np = np.where(mask_np > 0.5, np.float32(MASK_NEG),
                             np.float32(0.0)).astype(np.float32)

    w_qkv_fused, wpb = prepare_params(w_qkv, w_proj, b_proj)

    # block_b=BATCH -> single grid step (best on single-TC v5e/v6e).
    # On v7x, pass block_b=1 to split the two windows across both TensorCores.
    out = local_attention_head(x, w_qkv_fused, local_bias_np, wpb,
                               block_b=BATCH)
    out = jax.block_until_ready(out)

    ref = reference(x, w_qkv, w_proj, b_proj, jnp.asarray(mask_np))
    np.testing.assert_allclose(np.asarray(out), np.asarray(ref),
                               rtol=1e-4, atol=1e-4)
    print("KERNEL_OK")
</pallas_src>

<mosaic_0001>
module attributes {stable_mosaic.version = 11 : i64} {
  func.func @local_attn_kernel(%arg0: i32, %arg1: memref<2x64x32xf32, #tpu.memory_space<vmem>>, %arg2: memref<32x96xf32, #tpu.memory_space<vmem>>, %arg3: memref<128x128xf32, #tpu.memory_space<vmem>>, %arg4: memref<33x128xf32, #tpu.memory_space<vmem>>, %arg5: memref<128x128xf32, #tpu.memory_space<vmem>>) attributes {dimension_semantics = [#tpu.dimension_semantics<parallel>], iteration_bounds = array<i64: 1>, scalar_prefetch = 0 : i64, scratch_operands = 0 : i64, tpu.core_type = #tpu.core_type<tc>, window_params = [{transform_indices = @transform_0, window_bounds = array<i64: 2, 64, 32>}, {pipeline_mode = #tpu.pipeline_mode<synchronous>, transform_indices = @transform_1, window_bounds = array<i64: 32, 96>}, {pipeline_mode = #tpu.pipeline_mode<synchronous>, transform_indices = @transform_2, window_bounds = array<i64: 128, 128>}, {pipeline_mode = #tpu.pipeline_mode<synchronous>, transform_indices = @transform_3, window_bounds = array<i64: 33, 128>}, {transform_indices = @transform_4, window_bounds = array<i64: 128, 128>}]} {
    %c0 = arith.constant 0 : index
    %c0_0 = arith.constant 0 : index
    %c0_1 = arith.constant 0 : index
    %0 = vector.load %arg1[%c0, %c0_0, %c0_1] : memref<2x64x32xf32, #tpu.memory_space<vmem>>, vector<2x64x32xf32>
    %1 = vector.shape_cast %0 : vector<2x64x32xf32> to vector<128x32xf32>
    %c0_2 = arith.constant 0 : index
    %c0_3 = arith.constant 0 : index
    %2 = vector.load %arg2[%c0_2, %c0_3] : memref<32x96xf32, #tpu.memory_space<vmem>>, vector<32x96xf32>
    %cst = arith.constant dense<0.000000e+00> : vector<128x96xf32>
    %3 = tpu.matmul %1, %2, %cst {dimension_numbers = #tpu.dot_dimension_numbers<[1], [0], [0], [1], [0, 0, 1, 1], [], []>} : vector<128x32xf32>, vector<32x96xf32>, vector<128x96xf32> -> vector<128x96xf32>
    %4 = vector.extract_strided_slice %3 {offsets = [0, 0], sizes = [128, 8], strides = [1, 1]} : vector<128x96xf32> to vector<128x8xf32>
    %5 = vector.extract_strided_slice %3 {offsets = [0, 8], sizes = [128, 8], strides = [1, 1]} : vector<128x96xf32> to vector<128x8xf32>
    %6 = vector.extract_strided_slice %3 {offsets = [0, 16], sizes = [128, 8], strides = [1, 1]} : vector<128x96xf32> to vector<128x8xf32>
    %7 = vector.extract_strided_slice %3 {offsets = [0, 24], sizes = [128, 8], strides = [1, 1]} : vector<128x96xf32> to vector<128x8xf32>
    %8 = vector.shape_cast %4 : vector<128x8xf32> to vector<1x128x8xf32>
    %9 = vector.shape_cast %5 : vector<128x8xf32> to vector<1x128x8xf32>
    %10 = vector.shape_cast %6 : vector<128x8xf32> to vector<1x128x8xf32>
    %11 = vector.shape_cast %7 : vector<128x8xf32> to vector<1x128x8xf32>
    %12 = tpu.concatenate %8, %9, %10, %11 in 0 : vector<1x128x8xf32>, vector<1x128x8xf32>, vector<1x128x8xf32>, vector<1x128x8xf32> -> vector<4x128x8xf32>
    %13 = vector.extract_strided_slice %3 {offsets = [0, 32], sizes = [128, 8], strides = [1, 1]} : vector<128x96xf32> to vector<128x8xf32>
    %14 = vector.extract_strided_slice %3 {offsets = [0, 40], sizes = [128, 8], strides = [1, 1]} : vector<128x96xf32> to vector<128x8xf32>
    %15 = vector.extract_strided_slice %3 {offsets = [0, 48], sizes = [128, 8], strides = [1, 1]} : vector<128x96xf32> to vector<128x8xf32>
    %16 = vector.extract_strided_slice %3 {offsets = [0, 56], sizes = [128, 8], strides = [1, 1]} : vector<128x96xf32> to vector<128x8xf32>
    %17 = vector.shape_cast %13 : vector<128x8xf32> to vector<1x128x8xf32>
    %18 = vector.shape_cast %14 : vector<128x8xf32> to vector<1x128x8xf32>
    %19 = vector.shape_cast %15 : vector<128x8xf32> to vector<1x128x8xf32>
    %20 = vector.shape_cast %16 : vector<128x8xf32> to vector<1x128x8xf32>
    %21 = tpu.concatenate %17, %18, %19, %20 in 0 : vector<1x128x8xf32>, vector<1x128x8xf32>, vector<1x128x8xf32>, vector<1x128x8xf32> -> vector<4x128x8xf32>
    %22 = vector.extract_strided_slice %3 {offsets = [0, 64], sizes = [128, 8], strides = [1, 1]} : vector<128x96xf32> to vector<128x8xf32>
    %23 = vector.extract_strided_slice %3 {offsets = [0, 72], sizes = [128, 8], strides = [1, 1]} : vector<128x96xf32> to vector<128x8xf32>
    %24 = vector.extract_strided_slice %3 {offsets = [0, 80], sizes = [128, 8], strides = [1, 1]} : vector<128x96xf32> to vector<128x8xf32>
    %25 = vector.extract_strided_slice %3 {offsets = [0, 88], sizes = [128, 8], strides = [1, 1]} : vector<128x96xf32> to vector<128x8xf32>
    %26 = vector.shape_cast %22 : vector<128x8xf32> to vector<1x128x8xf32>
    %27 = vector.shape_cast %23 : vector<128x8xf32> to vector<1x128x8xf32>
    %28 = vector.shape_cast %24 : vector<128x8xf32> to vector<1x128x8xf32>
    %29 = vector.shape_cast %25 : vector<128x8xf32> to vector<1x128x8xf32>
    %30 = tpu.concatenate %26, %27, %28, %29 in 0 : vector<1x128x8xf32>, vector<1x128x8xf32>, vector<1x128x8xf32>, vector<1x128x8xf32> -> vector<4x128x8xf32>
    "tpu.trace_start"() <{level = 10 : i32, message = "hqd,hkd->hqk"}> : () -> ()
    %cst_4 = arith.constant dense<0.000000e+00> : vector<4x128x128xf32>
    %31 = tpu.matmul %12, %21, %cst_4 {dimension_numbers = #tpu.dot_dimension_numbers<[2], [2], [1], [1], [0, 0, 0, 1, 1, 1], [0], [0]>} : vector<4x128x8xf32>, vector<4x128x8xf32>, vector<4x128x128xf32> -> vector<4x128x128xf32>
    "tpu.trace_stop"() : () -> ()
    %c0_5 = arith.constant 0 : index
    %c0_6 = arith.constant 0 : index
    %32 = vector.load %arg3[%c0_5, %c0_6] : memref<128x128xf32, #tpu.memory_space<vmem>>, vector<128x128xf32>
    %33 = vector.shape_cast %32 : vector<128x128xf32> to vector<1x128x128xf32>
    %34 = vector.broadcast %33 : vector<1x128x128xf32> to vector<4x128x128xf32>
    %35 = arith.addf %31, %34 : vector<4x128x128xf32>
    %cst_7 = arith.constant dense<0xFF800000> : vector<4x128xf32>
    %36 = vector.multi_reduction <maximumf>, %35, %cst_7 [2] : vector<4x128x128xf32> to vector<4x128xf32>
    %37 = vector.shape_cast %36 : vector<4x128xf32> to vector<4x128x1xf32>
    %38 = vector.broadcast %37 : vector<4x128x1xf32> to vector<4x128x128xf32>
    %39 = arith.subf %35, %38 : vector<4x128x128xf32>
    %40 = math.exp %39 : vector<4x128x128xf32>
    %cst_8 = arith.constant dense<0.000000e+00> : vector<4x128xf32>
    %41 = vector.multi_reduction <add>, %40, %cst_8 [2] : vector<4x128x128xf32> to vector<4x128xf32>
    %42 = vector.shape_cast %41 : vector<4x128xf32> to vector<4x128x1xf32>
    %43 = tpu.reciprocal %42 : vector<4x128x1xf32> -> vector<4x128x1xf32>
    %44 = vector.broadcast %43 : vector<4x128x1xf32> to vector<4x128x128xf32>
    %45 = arith.mulf %40, %44 : vector<4x128x128xf32>
    "tpu.trace_start"() <{level = 10 : i32, message = "hqk,hkd->hqd"}> : () -> ()
    %cst_9 = arith.constant dense<0.000000e+00> : vector<4x128x8xf32>
    %46 = tpu.matmul %45, %30, %cst_9 {dimension_numbers = #tpu.dot_dimension_numbers<[2], [1], [1], [2], [0, 0, 0, 1, 1, 2], [0], [0]>} : vector<4x128x128xf32>, vector<4x128x8xf32>, vector<4x128x8xf32> -> vector<4x128x8xf32>
    "tpu.trace_stop"() : () -> ()
    %47 = vector.extract_strided_slice %46 {offsets = [0, 0, 0], sizes = [1, 128, 8], strides = [1, 1, 1]} : vector<4x128x8xf32> to vector<1x128x8xf32>
    %48 = vector.shape_cast %47 : vector<1x128x8xf32> to vector<128x8xf32>
    %49 = vector.extract_strided_slice %46 {offsets = [1, 0, 0], sizes = [1, 128, 8], strides = [1, 1, 1]} : vector<4x128x8xf32> to vector<1x128x8xf32>
    %50 = vector.shape_cast %49 : vector<1x128x8xf32> to vector<128x8xf32>
    %51 = vector.extract_strided_slice %46 {offsets = [2, 0, 0], sizes = [1, 128, 8], strides = [1, 1, 1]} : vector<4x128x8xf32> to vector<1x128x8xf32>
    %52 = vector.shape_cast %51 : vector<1x128x8xf32> to vector<128x8xf32>
    %53 = vector.extract_strided_slice %46 {offsets = [3, 0, 0], sizes = [1, 128, 8], strides = [1, 1, 1]} : vector<4x128x8xf32> to vector<1x128x8xf32>
    %54 = vector.shape_cast %53 : vector<1x128x8xf32> to vector<128x8xf32>
    %55 = tpu.concatenate %48, %50, %52, %54 in 1 : vector<128x8xf32>, vector<128x8xf32>, vector<128x8xf32>, vector<128x8xf32> -> vector<128x32xf32>
    %c0_10 = arith.constant 0 : index
    %c0_11 = arith.constant 0 : index
    %56 = vector.load %arg4[%c0_10, %c0_11] : memref<33x128xf32, #tpu.memory_space<vmem>>, vector<33x128xf32>
    %57 = vector.extract_strided_slice %56 {offsets = [0, 0], sizes = [32, 128], strides = [1, 1]} : vector<33x128xf32> to vector<32x128xf32>
    %cst_12 = arith.constant dense<0.000000e+00> : vector<128x128xf32>
    %58 = tpu.matmul %55, %57, %cst_12 {dimension_numbers = #tpu.dot_dimension_numbers<[1], [0], [0], [1], [0, 0, 1, 1], [], []>} : vector<128x32xf32>, vector<32x128xf32>, vector<128x128xf32> -> vector<128x128xf32>
    %59 = vector.extract_strided_slice %56 {offsets = [32, 0], sizes = [1, 128], strides = [1, 1]} : vector<33x128xf32> to vector<1x128xf32>
    %60 = vector.broadcast %59 : vector<1x128xf32> to vector<128x128xf32>
    %61 = arith.addf %58, %60 : vector<128x128xf32>
    %c0_13 = arith.constant 0 : index
    %c0_14 = arith.constant 0 : index
    %62 = vector.load %arg5[%c0_13, %c0_14] : memref<128x128xf32, #tpu.memory_space<vmem>>, vector<128x128xf32>
    tpu.vector_store %arg5[%c0_13, %c0_14], %61 {strides = array<i32>} : memref<128x128xf32, #tpu.memory_space<vmem>>, vector<128x128xf32>,
    return
  }
  func.func @transform_0(%arg0: i32) -> (i32, i32, i32) {
    %c0_i32 = arith.constant 0 : i32
    %c0_i32_0 = arith.constant 0 : i32
    %c0_i32_1 = arith.constant 0 : i32
    return %arg0, %c0_i32, %c0_i32_0 : i32, i32, i32
  }
  func.func @transform_1(%arg0: i32) -> (i32, i32) {
    %c0_i32 = arith.constant 0 : i32
    %c0_i32_0 = arith.constant 0 : i32
    %c0_i32_1 = arith.constant 0 : i32
    return %c0_i32, %c0_i32_0 : i32, i32
  }
  func.func @transform_2(%arg0: i32) -> (i32, i32) {
    %c0_i32 = arith.constant 0 : i32
    %c0_i32_0 = arith.constant 0 : i32
    %c0_i32_1 = arith.constant 0 : i32
    return %c0_i32, %c0_i32_0 : i32, i32
  }
  func.func @transform_3(%arg0: i32) -> (i32, i32) {
    %c0_i32 = arith.constant 0 : i32
    %c0_i32_0 = arith.constant 0 : i32
    %c0_i32_1 = arith.constant 0 : i32
    return %c0_i32, %c0_i32_0 : i32, i32
  }
  func.func @transform_4(%arg0: i32) -> (i32, i32) {
    %c0_i32 = arith.constant 0 : i32
    %c0_i32_0 = arith.constant 0 : i32
    return %arg0, %c0_i32 : i32, i32
  }
}

</mosaic_0001>

<llo_original>
// kernel: tpu_custom_call.1
$region0: #{tpu_custom_call.1}
  #allocation0 [shape = 'u32[]', space=smem, size = 0x4, offset = 0x4, fixed_abs, tag = 'smem constant byte address 0x4 - core index']
  #allocation1 [shape = 'u32[144,128]{1,0:T(1,128)}', space=vmem, size = 0x12000, scoped, tag = 'internal scratch']
  %s0 = inlined_call_operand.vmem [shape: f32[2,64,32], index: 0, kind: input, shape index: {}]
  %s1 = inlined_call_operand.hbm [shape: f32[32,96], index: 1, kind: input, shape index: {}]
  %s2 = inlined_call_operand.vmem [shape: f32[128,128], index: 2, kind: input, shape index: {}]
  %s3 = inlined_call_operand.vmem [shape: f32[33,128], index: 3, kind: input, shape index: {}]
  %s4 = inlined_call_operand.hbm [shape: f32[128,128], index: 4, kind: output, shape index: {}]
  %s5 = sld [smem:[#allocation0]]
  $region30: #{tpu_custom_call.1} parent=0
    _
  %s7 = ssub.s32 1, %s5
  %s8 = scalar_select 0, %s7, %s5
  $region1: #{tpu_custom_call.1} parent=0
    #allocation2 [shape = 'u8[16384]{0}', space=vmem, size = 0x4000, scoped, tag = 'input window, operand 1, single buffered']
    #allocation3 [shape = 's32[1]{0}', space=sflag, size = 0x4, scoped, tag = 'scoped memory for tpu_custom_call.1']
    #allocation4 [shape = 's32[1]{0}', space=sflag, size = 0x4, scoped, tag = 'scoped memory for tpu_custom_call.1']
    #allocation5 [shape = 'u8[65536]{0}', space=vmem, size = 0x10000, scoped, tag = 'output window, operand 0, single buffered']
    %9 = vsyncpa [#allocation3], 0
    %10 = vsyncpa [#allocation4], 0
    // Predicated region
    $region2: #{tpu_custom_call.1} parent=1 // pred_check
      _
    $region3: #{tpu_custom_call.1} parent=1 // pred_check_branch
      %12 = sbr.rel (0) target = $region5
    $region4: #{tpu_custom_call.1} parent=1 // pred_region
      _
    $region5: #{tpu_custom_call.1} parent=1 // pred_fallthru
      _
    // Predicated region
    $region6: #{tpu_custom_call.1} parent=1 // pred_check
      _
    $region7: #{tpu_custom_call.1} parent=1 // pred_check_branch
      %14 = sbr.rel (0) target = $region9
    $region8: #{tpu_custom_call.1} parent=1 // pred_region
      %s16 = ssub.s32 512, 512
      %17 = vsyncadd [#allocation3], %s16
      %s18 = sshll.u32 [#allocation2], 4
      %s19 = int_to_ptr.vmem [resolvable:$true] %s18
      %24 = dma.hbm_to_vmem [thread:$0]  %s1, 512, %s19, [#allocation3], 128, 128, 8
    $region9: #{tpu_custom_call.1} parent=1 // pred_fallthru
      _
    // Predicated region
    $region10: #{tpu_custom_call.1} parent=1 // pred_check
      _
    $region11: #{tpu_custom_call.1} parent=1 // pred_check_branch
      %26 = sbr.rel (0) target = $region13
    $region12: #{tpu_custom_call.1} parent=1 // pred_region
      _
    $region13: #{tpu_custom_call.1} parent=1 // pred_fallthru
      _
    // Predicated region
    $region14: #{tpu_custom_call.1} parent=1 // pred_check
      _
    $region15: #{tpu_custom_call.1} parent=1 // pred_check_branch
      %28 = sbr.rel (0) target = $region17
    $region16: #{tpu_custom_call.1} parent=1 // pred_region
      _
    $region17: #{tpu_custom_call.1} parent=1 // pred_fallthru
      _
    // Predicated region
    $region18: #{tpu_custom_call.1} parent=1 // pred_check
      _
    $region19: #{tpu_custom_call.1} parent=1 // pred_check_branch
      %30 = sbr.rel (0) target = $region21
    $region20: #{tpu_custom_call.1} parent=1 // pred_region
      %31 = dma.done [#allocation3], 512
    $region21: #{tpu_custom_call.1} parent=1 // pred_fallthru
      _
    %v32 = vld [vmem:[%s0] sm:$0xff]
    %v33 = vld [vmem:[%s0 + $0x8] sm:$0xff]
    %v34 = vld [vmem:[%s0 + $0x10] sm:$0xff]
    %v35 = vld [vmem:[%s0 + $0x18] sm:$0xff]
    %v36 = vld [vmem:[%s0 + $0x20] sm:$0xff]
    %v37 = vld [vmem:[%s0 + $0x28] sm:$0xff]
    %v38 = vld [vmem:[%s0 + $0x30] sm:$0xff]
    %v39 = vld [vmem:[%s0 + $0x38] sm:$0xff]
    %v40 = vld [vmem:[%s0 + $0x40] sm:$0xff]
    %v41 = vld [vmem:[%s0 + $0x48] sm:$0xff]
    %v42 = vld [vmem:[%s0 + $0x50] sm:$0xff]
    %v43 = vld [vmem:[%s0 + $0x58] sm:$0xff]
    %v44 = vld [vmem:[%s0 + $0x60] sm:$0xff]
    %v45 = vld [vmem:[%s0 + $0x68] sm:$0xff]
    %v46 = vld [vmem:[%s0 + $0x70] sm:$0xff]
    %v47 = vld [vmem:[%s0 + $0x78] sm:$0xff]
    %v48 = vld [vmem:[#allocation2] sm:$0xff]
    %v49 = vld [vmem:[#allocation2 + $0x8] sm:$0xff]
    %v50 = vld [vmem:[#allocation2 + $0x10] sm:$0xff]
    %v51 = vld [vmem:[#allocation2 + $0x18] sm:$0xff]
    %vm52 = vcmask 261120
    %v54 = vsel %vm52, %v32, 0
    %v57 = vsel %vm52, %v33, 0
    %v60 = vsel %vm52, %v34, 0
    %v63 = vsel %vm52, %v35, 0
    %v66 = vsel %vm52, %v36, 0
    %v69 = vsel %vm52, %v37, 0
    %v72 = vsel %vm52, %v38, 0
    %v75 = vsel %vm52, %v39, 0
    %v78 = vsel %vm52, %v40, 0
    %v81 = vsel %vm52, %v41, 0
    %v84 = vsel %vm52, %v42, 0
    %v87 = vsel %vm52, %v43, 0
    %v90 = vsel %vm52, %v44, 0
    %v93 = vsel %vm52, %v45, 0
    %v96 = vsel %vm52, %v46, 0
    %v99 = vsel %vm52, %v47, 0
    %101 = vmatprep.subr.mxu0 0.0
    %102 = vmatpush1.msra.mxu0 0.0
    %103 = vmatprep.subr.mxu0 0.0
    %104 = vmatpush1.msra.mxu0 0.0
    %105 = vmatprep.subr.mxu0 0.0
    %106 = vmatpush1.msra.mxu0 0.0
    %107 = vmatprep.subr.mxu0 0.0
    %108 = vmatpush1.msra.mxu0 0.0
    %109 = vmatprep.subr.mxu0 0.0
    %110 = vmatpush1.msra.mxu0 0.0
    %111 = vmatprep.subr.mxu0 0.0
    %112 = vmatpush1.msra.mxu0 0.0
    %113 = vmatprep.subr.mxu0 0.0
    %114 = vmatpush1.msra.mxu0 0.0
    %115 = vmatprep.subr.mxu0 0.0
    %116 = vmatpush1.msra.mxu0 0.0
    %117 = vmatprep.subr.mxu0 0.0
    %118 = vmatpush1.msra.mxu0 0.0
    %119 = vmatprep.subr.mxu0 0.0
    %120 = vmatpush1.msra.mxu0 0.0
    %121 = vmatprep.subr.mxu0 0.0
    %122 = vmatpush1.msra.mxu0 0.0
    %123 = vmatprep.subr.mxu0 0.0
    %124 = vmatpush1.msra.mxu0 0.0
    %125 = vmatprep.subr.mxu0 0.0
    %126 = vmatpush1.msra.mxu0 %v51
    %127 = vmatprep.subr.mxu0 0.0
    %128 = vmatpush1.msra.mxu0 %v50
    %129 = vmatprep.subr.mxu0 0.0
    %130 = vmatpush1.msra.mxu0 %v49
    %131 = vmatprep.subr.mxu0 0.0
    %132 = vmatpush1.msra.mxu0 %v48
    %133 = vmatprep.subr.mxu0 0.0
    %134 = vmatpush2.msra.mxu0 0.0
    %135 = vmatprep.subr.mxu0 0.0
    %136 = vmatpush2.msra.mxu0 0.0
    %137 = vmatprep.subr.mxu0 0.0
    %138 = vmatpush2.msra.mxu0 0.0
    %139 = vmatprep.subr.mxu0 0.0
    %140 = vmatpush2.msra.mxu0 0.0
    %141 = vmatprep.subr.mxu0 0.0
    %142 = vmatpush2.msra.mxu0 0.0
    %143 = vmatprep.subr.mxu0 0.0
    %144 = vmatpush2.msra.mxu0 0.0
    %145 = vmatprep.subr.mxu0 0.0
    %146 = vmatpush2.msra.mxu0 0.0
    %147 = vmatprep.subr.mxu0 0.0
    %148 = vmatpush2.msra.mxu0 0.0
    %149 = vmatprep.subr.mxu0 0.0
    %150 = vmatpush2.msra.mxu0 0.0
    %151 = vmatprep.subr.mxu0 0.0
    %152 = vmatpush2.msra.mxu0 0.0
    %153 = vmatprep.subr.mxu0 0.0
    %154 = vmatpush2.msra.mxu0 0.0
    %155 = vmatprep.subr.mxu0 0.0
    %156 = vmatpush2.msra.mxu0 0.0
    %157 = vmatprep.subr.mxu0 0.0
    %158 = vmatpush2.msra.mxu0 0.0
    %159 = vmatprep.subr.mxu0 0.0
    %160 = vmatpush2.msra.mxu0 0.0
    %161 = vmatprep.subr.mxu0 0.0
    %162 = vmatpush2.msra.mxu0 0.0
    %163 = vmatprep.subr.mxu0 0.0
    %164 = vmatpush2.msra.mxu0 0.0
    %165 = vmatprep.mubr.f32.mxu0 0.0
    %166 = vmatmul.mubr.f32.gmra.mxu0 %v54
    %v167 = vpop.f32.mrf.mxu0
    %v168 = vadd.f32 0.0, %v167
    %v169 = vpop.f32.mrf.mxu0
    %170 = vmatprep.mubr.f32.mxu0 0.0
    %171 = vmatmul.mubr.f32.gmra.mxu0 %v57
    %v172 = vpop.f32.mrf.mxu0
    %v173 = vadd.f32 0.0, %v172
    %v174 = vpop.f32.mrf.mxu0
    %175 = vmatprep.mubr.f32.mxu0 0.0
    %176 = vmatmul.mubr.f32.gmra.mxu0 %v60
    %v177 = vpop.f32.mrf.mxu0
    %v178 = vadd.f32 0.0, %v177
    %v179 = vpop.f32.mrf.mxu0
    %180 = vmatprep.mubr.f32.mxu0 0.0
    %181 = vmatmul.mubr.f32.gmra.mxu0 %v63
    %v182 = vpop.f32.mrf.mxu0
    %v183 = vadd.f32 0.0, %v182
    %v184 = vpop.f32.mrf.mxu0
    %185 = vmatprep.mubr.f32.mxu0 0.0
    %186 = vmatmul.mubr.f32.gmra.mxu0 %v66
    %v187 = vpop.f32.mrf.mxu0
    %v188 = vadd.f32 0.0, %v187
    %v189 = vpop.f32.mrf.mxu0
    %190 = vmatprep.mubr.f32.mxu0 0.0
    %191 = vmatmul.mubr.f32.gmra.mxu0 %v69
    %v192 = vpop.f32.mrf.mxu0
    %v193 = vadd.f32 0.0, %v192
    %v194 = vpop.f32.mrf.mxu0
    %195 = vmatprep.mubr.f32.mxu0 0.0
    %196 = vmatmul.mubr.f32.gmra.mxu0 %v72
    %v197 = vpop.f32.mrf.mxu0
    %v198 = vadd.f32 0.0, %v197
    %v199 = vpop.f32.mrf.mxu0
    %200 = vmatprep.mubr.f32.mxu0 0.0
    %201 = vmatmul.mubr.f32.gmra.mxu0 %v75
    %v202 = vpop.f32.mrf.mxu0
    %v203 = vadd.f32 0.0, %v202
    %v204 = vpop.f32.mrf.mxu0
    %205 = vmatprep.mubr.f32.mxu0 0.0
    %206 = vmatmul.mubr.f32.gmra.mxu0 %v78
    %v207 = vpop.f32.mrf.mxu0
    %v208 = vadd.f32 0.0, %v207
    %v209 = vpop.f32.mrf.mxu0
    %210 = vmatprep.mubr.f32.mxu0 0.0
    %211 = vmatmul.mubr.f32.gmra.mxu0 %v81
    %v212 = vpop.f32.mrf.mxu0
    %v213 = vadd.f32 0.0, %v212
    %v214 = vpop.f32.mrf.mxu0
    %215 = vmatprep.mubr.f32.mxu0 0.0
    %216 = vmatmul.mubr.f32.gmra.mxu0 %v84
    %v217 = vpop.f32.mrf.mxu0
    %v218 = vadd.f32 0.0, %v217
    %v219 = vpop.f32.mrf.mxu0
    %220 = vmatprep.mubr.f32.mxu0 0.0
    %221 = vmatmul.mubr.f32.gmra.mxu0 %v87
    %v222 = vpop.f32.mrf.mxu0
    %v223 = vadd.f32 0.0, %v222
    %v224 = vpop.f32.mrf.mxu0
    %225 = vmatprep.mubr.f32.mxu0 0.0
    %226 = vmatmul.mubr.f32.gmra.mxu0 %v90
    %v227 = vpop.f32.mrf.mxu0
    %v228 = vadd.f32 0.0, %v227
    %v229 = vpop.f32.mrf.mxu0
    %230 = vmatprep.mubr.f32.mxu0 0.0
    %231 = vmatmul.mubr.f32.gmra.mxu0 %v93
    %v232 = vpop.f32.mrf.mxu0
    %v233 = vadd.f32 0.0, %v232
    %v234 = vpop.f32.mrf.mxu0
    %235 = vmatprep.mubr.f32.mxu0 0.0
    %236 = vmatmul.mubr.f32.gmra.mxu0 %v96
    %v237 = vpop.f32.mrf.mxu0
    %v238 = vadd.f32 0.0, %v237
    %v239 = vpop.f32.mrf.mxu0
    %240 = vmatprep.mubr.f32.mxu0 0.0
    %241 = vmatmul.mubr.f32.gmra.mxu0 %v99
    %v242 = vpop.f32.mrf.mxu0
    %v243 = vadd.f32 0.0, %v242
    %v244 = vpop.f32.mrf.mxu0
    %245 = vdwg.mxu0
    %262 = vrot.lane.b32.xlu0 %v168, 120
    %v263 = vpop.permute.xlu0 %262
    %264 = vrot.lane.b32.xlu0 %v173, 120
    %v265 = vpop.permute.xlu0 %264
    %266 = vrot.lane.b32.xlu0 %v178, 120
    %v267 = vpop.permute.xlu0 %266
    %268 = vrot.lane.b32.xlu0 %v183, 120
    %v269 = vpop.permute.xlu0 %268
    %270 = vrot.lane.b32.xlu0 %v188, 120
    %v271 = vpop.permute.xlu0 %270
    %272 = vrot.lane.b32.xlu0 %v193, 120
    %v273 = vpop.permute.xlu0 %272
    %274 = vrot.lane.b32.xlu0 %v198, 120
    %v275 = vpop.permute.xlu0 %274
    %276 = vrot.lane.b32.xlu0 %v203, 120
    %v277 = vpop.permute.xlu0 %276
    %278 = vrot.lane.b32.xlu0 %v208, 120
    %v279 = vpop.permute.xlu0 %278
    %280 = vrot.lane.b32.xlu0 %v213, 120
    %v281 = vpop.permute.xlu0 %280
    %282 = vrot.lane.b32.xlu0 %v218, 120
    %v283 = vpop.permute.xlu0 %282
    %284 = vrot.lane.b32.xlu0 %v223, 120
    %v285 = vpop.permute.xlu0 %284
    %286 = vrot.lane.b32.xlu0 %v228, 120
    %v287 = vpop.permute.xlu0 %286
    %288 = vrot.lane.b32.xlu0 %v233, 120
    %v289 = vpop.permute.xlu0 %288
    %290 = vrot.lane.b32.xlu0 %v238, 120
    %v291 = vpop.permute.xlu0 %290
    %292 = vrot.lane.b32.xlu0 %v243, 120
    %v293 = vpop.permute.xlu0 %292
    %294 = vrot.lane.b32.xlu0 %v168, 112
    %v295 = vpop.permute.xlu0 %294
    %296 = vrot.lane.b32.xlu0 %v173, 112
    %v297 = vpop.permute.xlu0 %296
    %298 = vrot.lane.b32.xlu0 %v178, 112
    %v299 = vpop.permute.xlu0 %298
    %300 = vrot.lane.b32.xlu0 %v183, 112
    %v301 = vpop.permute.xlu0 %300
    %302 = vrot.lane.b32.xlu0 %v188, 112
    %v303 = vpop.permute.xlu0 %302
    %304 = vrot.lane.b32.xlu0 %v193, 112
    %v305 = vpop.permute.xlu0 %304
    %306 = vrot.lane.b32.xlu0 %v198, 112
    %v307 = vpop.permute.xlu0 %306
    %308 = vrot.lane.b32.xlu0 %v203, 112
    %v309 = vpop.permute.xlu0 %308
    %310 = vrot.lane.b32.xlu0 %v208, 112
    %v311 = vpop.permute.xlu0 %310
    %312 = vrot.lane.b32.xlu0 %v213, 112
    %v313 = vpop.permute.xlu0 %312
    %314 = vrot.lane.b32.xlu0 %v218, 112
    %v315 = vpop.permute.xlu0 %314
    %316 = vrot.lane.b32.xlu0 %v223, 112
    %v317 = vpop.permute.xlu0 %316
    %318 = vrot.lane.b32.xlu0 %v228, 112
    %v319 = vpop.permute.xlu0 %318
    %320 = vrot.lane.b32.xlu0 %v233, 112
    %v321 = vpop.permute.xlu0 %320
    %322 = vrot.lane.b32.xlu0 %v238, 112
    %v323 = vpop.permute.xlu0 %322
    %324 = vrot.lane.b32.xlu0 %v243, 112
    %v325 = vpop.permute.xlu0 %324
    %326 = vrot.lane.b32.xlu0 %v168, 104
    %v327 = vpop.permute.xlu0 %326
    %328 = vrot.lane.b32.xlu0 %v173, 104
    %v329 = vpop.permute.xlu0 %328
    %330 = vrot.lane.b32.xlu0 %v178, 104
    %v331 = vpop.permute.xlu0 %330
    %332 = vrot.lane.b32.xlu0 %v183, 104
    %v333 = vpop.permute.xlu0 %332
    %334 = vrot.lane.b32.xlu0 %v188, 104
    %v335 = vpop.permute.xlu0 %334
    %336 = vrot.lane.b32.xlu0 %v193, 104
    %v337 = vpop.permute.xlu0 %336
    %338 = vrot.lane.b32.xlu0 %v198, 104
    %v339 = vpop.permute.xlu0 %338
    %340 = vrot.lane.b32.xlu0 %v203, 104
    %v341 = vpop.permute.xlu0 %340
    %342 = vrot.lane.b32.xlu0 %v208, 104
    %v343 = vpop.permute.xlu0 %342
    %344 = vrot.lane.b32.xlu0 %v213, 104
    %v345 = vpop.permute.xlu0 %344
    %346 = vrot.lane.b32.xlu0 %v218, 104
    %v347 = vpop.permute.xlu0 %346
    %348 = vrot.lane.b32.xlu0 %v223, 104
    %v349 = vpop.permute.xlu0 %348
    %350 = vrot.lane.b32.xlu0 %v228, 104
    %v351 = vpop.permute.xlu0 %350
    %352 = vrot.lane.b32.xlu0 %v233, 104
    %v353 = vpop.permute.xlu0 %352
    %354 = vrot.lane.b32.xlu0 %v238, 104
    %v355 = vpop.permute.xlu0 %354
    %356 = vrot.lane.b32.xlu0 %v243, 104
    %v357 = vpop.permute.xlu0 %356
    %v358 = vld [vmem:[%s2] sm:$0xff]
    %v359 = vld [vmem:[%s2 + $0x8] sm:$0xff]
    %v360 = vld [vmem:[%s2 + $0x10] sm:$0xff]
    %v361 = vld [vmem:[%s2 + $0x18] sm:$0xff]
    %v362 = vld [vmem:[%s2 + $0x20] sm:$0xff]
    %v363 = vld [vmem:[%s2 + $0x28] sm:$0xff]
    %v364 = vld [vmem:[%s2 + $0x30] sm:$0xff]
    %v365 = vld [vmem:[%s2 + $0x38] sm:$0xff]
    %v366 = vld [vmem:[%s2 + $0x40] sm:$0xff]
    %v367 = vld [vmem:[%s2 + $0x48] sm:$0xff]
    %v368 = vld [vmem:[%s2 + $0x50] sm:$0xff]
    %v369 = vld [vmem:[%s2 + $0x58] sm:$0xff]
    %v370 = vld [vmem:[%s2 + $0x60] sm:$0xff]
    %v371 = vld [vmem:[%s2 + $0x68] sm:$0xff]
    %v372 = vld [vmem:[%s2 + $0x70] sm:$0xff]
    %v373 = vld [vmem:[%s2 + $0x78] sm:$0xff]
    %374 = vrot.lane.b32.xlu0 %v168, 96
    %v375 = vpop.permute.xlu0 %374
    %376 = vrot.lane.b32.xlu0 %v173, 96
    %v377 = vpop.permute.xlu0 %376
    %378 = vrot.lane.b32.xlu0 %v178, 96
    %v379 = vpop.permute.xlu0 %378
    %380 = vrot.lane.b32.xlu0 %v183, 96
    %v381 = vpop.permute.xlu0 %380
    %382 = vrot.lane.b32.xlu0 %v188, 96
    %v383 = vpop.permute.xlu0 %382
    %384 = vrot.lane.b32.xlu0 %v193, 96
    %v385 = vpop.permute.xlu0 %384
    %386 = vrot.lane.b32.xlu0 %v198, 96
    %v387 = vpop.permute.xlu0 %386
    %388 = vrot.lane.b32.xlu0 %v203, 96
    %v389 = vpop.permute.xlu0 %388
    %390 = vrot.lane.b32.xlu0 %v208, 96
    %v391 = vpop.permute.xlu0 %390
    %392 = vrot.lane.b32.xlu0 %v213, 96
    %v393 = vpop.permute.xlu0 %392
    %394 = vrot.lane.b32.xlu0 %v218, 96
    %v395 = vpop.permute.xlu0 %394
    %396 = vrot.lane.b32.xlu0 %v223, 96
    %v397 = vpop.permute.xlu0 %396
    %398 = vrot.lane.b32.xlu0 %v228, 96
    %v399 = vpop.permute.xlu0 %398
    %400 = vrot.lane.b32.xlu0 %v233, 96
    %v401 = vpop.permute.xlu0 %400
    %402 = vrot.lane.b32.xlu0 %v238, 96
    %v403 = vpop.permute.xlu0 %402
    %404 = vrot.lane.b32.xlu0 %v243, 96
    %v405 = vpop.permute.xlu0 %404
    %vm406 = vcmask 64512
    %v407 = vsel %vm406, %v168, 0
    %v409 = vsel %vm406, %v173, 0
    %v411 = vsel %vm406, %v178, 0
    %v413 = vsel %vm406, %v183, 0
    %v415 = vsel %vm406, %v188, 0
    %v417 = vsel %vm406, %v193, 0
    %v419 = vsel %vm406, %v198, 0
    %v421 = vsel %vm406, %v203, 0
    %v423 = vsel %vm406, %v208, 0
    %v425 = vsel %vm406, %v213, 0
    %v427 = vsel %vm406, %v218, 0
    %v429 = vsel %vm406, %v223, 0
    %v431 = vsel %vm406, %v228, 0
    %v433 = vsel %vm406, %v233, 0
    %v435 = vsel %vm406, %v238, 0
    %v437 = vsel %vm406, %v243, 0
    %v439 = vsel %vm406, %v375, 0
    %v441 = vsel %vm406, %v377, 0
    %v443 = vsel %vm406, %v379, 0
    %v445 = vsel %vm406, %v381, 0
    %v447 = vsel %vm406, %v383, 0
    %v449 = vsel %vm406, %v385, 0
    %v451 = vsel %vm406, %v387, 0
    %v453 = vsel %vm406, %v389, 0
    %v455 = vsel %vm406, %v391, 0
    %v457 = vsel %vm406, %v393, 0
    %v459 = vsel %vm406, %v395, 0
    %v461 = vsel %vm406, %v397, 0
    %v463 = vsel %vm406, %v399, 0
    %v465 = vsel %vm406, %v401, 0
    %v467 = vsel %vm406, %v403, 0
    %v469 = vsel %vm406, %v405, 0
    %471 = vmatprep.subr.mxu0 0.0
    %472 = vmatpush1.xpose.msra.mxu0 %v469
    %473 = vmatprep.subr.mxu0 0.0
    %474 = vmatpush1.xpose.msra.mxu0 %v467
    %475 = vmatprep.subr.mxu0 0.0
    %476 = vmatpush1.xpose.msra.mxu0 %v465
    %477 = vmatprep.subr.mxu0 0.0
    %478 = vmatpush1.xpose.msra.mxu0 %v463
    %479 = vmatprep.subr.mxu0 0.0
    %480 = vmatpush1.xpose.msra.mxu0 %v461
    %481 = vmatprep.subr.mxu0 0.0
    %482 = vmatpush1.xpose.msra.mxu0 %v459
    %483 = vmatprep.subr.mxu0 0.0
    %484 = vmatpush1.xpose.msra.mxu0 %v457
    %485 = vmatprep.subr.mxu0 0.0
    %486 = vmatpush1.xpose.msra.mxu0 %v455
    %487 = vmatprep.subr.mxu0 0.0
    %488 = vmatpush1.xpose.msra.mxu0 %v453
    %489 = vmatprep.subr.mxu0 0.0
    %490 = vmatpush1.xpose.msra.mxu0 %v451
    %491 = vmatprep.subr.mxu0 0.0
    %492 = vmatpush1.xpose.msra.mxu0 %v449
    %493 = vmatprep.subr.mxu0 0.0
    %494 = vmatpush1.xpose.msra.mxu0 %v447
    %495 = vmatprep.subr.mxu0 0.0
    %496 = vmatpush1.xpose.msra.mxu0 %v445
    %497 = vmatprep.subr.mxu0 0.0
    %498 = vmatpush1.xpose.msra.mxu0 %v443
    %499 = vmatprep.subr.mxu0 0.0
    %500 = vmatpush1.xpose.msra.mxu0 %v441
    %501 = vmatprep.subr.mxu0 0.0
    %502 = vmatpush1.xpose.msra.mxu0 %v439
    %503 = vmatprep.subr.mxu0 0.0
    %504 = vmatpush2.xpose.msra.mxu0 0.0
    %505 = vmatprep.subr.mxu0 0.0
    %506 = vmatpush2.xpose.msra.mxu0 0.0
    %507 = vmatprep.subr.mxu0 0.0
    %508 = vmatpush2.xpose.msra.mxu0 0.0
    %509 = vmatprep.subr.mxu0 0.0
    %510 = vmatpush2.xpose.msra.mxu0 0.0
    %511 = vmatprep.subr.mxu0 0.0
    %512 = vmatpush2.xpose.msra.mxu0 0.0
    %513 = vmatprep.subr.mxu0 0.0
    %514 = vmatpush2.xpose.msra.mxu0 0.0
    %515 = vmatprep.subr.mxu0 0.0
    %516 = vmatpush2.xpose.msra.mxu0 0.0
    %517 = vmatprep.subr.mxu0 0.0
    %518 = vmatpush2.xpose.msra.mxu0 0.0
    %519 = vmatprep.subr.mxu0 0.0
    %520 = vmatpush2.xpose.msra.mxu0 0.0
    %521 = vmatprep.subr.mxu0 0.0
    %522 = vmatpush2.xpose.msra.mxu0 0.0
    %523 = vmatprep.subr.mxu0 0.0
    %524 = vmatpush2.xpose.msra.mxu0 0.0
    %525 = vmatprep.subr.mxu0 0.0
    %526 = vmatpush2.xpose.msra.mxu0 0.0
    %527 = vmatprep.subr.mxu0 0.0
    %528 = vmatpush2.xpose.msra.mxu0 0.0
    %529 = vmatprep.subr.mxu0 0.0
    %530 = vmatpush2.xpose.msra.mxu0 0.0
    %531 = vmatprep.subr.mxu0 0.0
    %532 = vmatpush2.xpose.msra.mxu0 0.0
    %533 = vmatprep.subr.mxu0 0.0
    %534 = vmatpush2.xpose.msra.mxu0 0.0
    %535 = vmatprep.mubr.f32.mxu0 0.0
    %536 = vmatmul.mubr.f32.gmra.mxu0 %v407
    %v537 = vpop.f32.mrf.mxu0
    %v538 = vadd.f32 %v358, %v537
    %v539 = vpop.f32.mrf.mxu0
    %540 = vmatprep.mubr.f32.mxu0 0.0
    %541 = vmatmul.mubr.f32.gmra.mxu0 %v409
    %v542 = vpop.f32.mrf.mxu0
    %v543 = vadd.f32 %v359, %v542
    %v544 = vpop.f32.mrf.mxu0
    %545 = vmatprep.mubr.f32.mxu0 0.0
    %546 = vmatmul.mubr.f32.gmra.mxu0 %v411
    %v547 = vpop.f32.mrf.mxu0
    %v548 = vadd.f32 %v360, %v547
    %v549 = vpop.f32.mrf.mxu0
    %550 = vmatprep.mubr.f32.mxu0 0.0
    %551 = vmatmul.mubr.f32.gmra.mxu0 %v413
    %v552 = vpop.f32.mrf.mxu0
    %v553 = vadd.f32 %v361, %v552
    %v554 = vpop.f32.mrf.mxu0
    %555 = vmatprep.mubr.f32.mxu0 0.0
    %556 = vmatmul.mubr.f32.gmra.mxu0 %v415
    %v557 = vpop.f32.mrf.mxu0
    %v558 = vadd.f32 %v362, %v557
    %v559 = vpop.f32.mrf.mxu0
    %560 = vmatprep.mubr.f32.mxu0 0.0
    %561 = vmatmul.mubr.f32.gmra.mxu0 %v417
    %v562 = vpop.f32.mrf.mxu0
    %v563 = vadd.f32 %v363, %v562
    %v564 = vpop.f32.mrf.mxu0
    %565 = vmatprep.mubr.f32.mxu0 0.0
    %566 = vmatmul.mubr.f32.gmra.mxu0 %v419
    %v567 = vpop.f32.mrf.mxu0
    %v568 = vadd.f32 %v364, %v567
    %v569 = vpop.f32.mrf.mxu0
    %570 = vmatprep.mubr.f32.mxu0 0.0
    %571 = vmatmul.mubr.f32.gmra.mxu0 %v421
    %v572 = vpop.f32.mrf.mxu0
    %v573 = vadd.f32 %v365, %v572
    %v574 = vpop.f32.mrf.mxu0
    %575 = vmatprep.mubr.f32.mxu0 0.0
    %576 = vmatmul.mubr.f32.gmra.mxu0 %v423
    %v577 = vpop.f32.mrf.mxu0
    %v578 = vadd.f32 %v366, %v577
    %v579 = vpop.f32.mrf.mxu0
    %580 = vmatprep.mubr.f32.mxu0 0.0
    %581 = vmatmul.mubr.f32.gmra.mxu0 %v425
    %v582 = vpop.f32.mrf.mxu0
    %v583 = vadd.f32 %v367, %v582
    %v584 = vpop.f32.mrf.mxu0
    %585 = vmatprep.mubr.f32.mxu0 0.0
    %586 = vmatmul.mubr.f32.gmra.mxu0 %v427
    %v587 = vpop.f32.mrf.mxu0
    %v588 = vadd.f32 %v368, %v587
    %v589 = vpop.f32.mrf.mxu0
    %590 = vmatprep.mubr.f32.mxu0 0.0
    %591 = vmatmul.mubr.f32.gmra.mxu0 %v429
    %v592 = vpop.f32.mrf.mxu0
    %v593 = vadd.f32 %v369, %v592
    %v594 = vpop.f32.mrf.mxu0
    %595 = vmatprep.mubr.f32.mxu0 0.0
    %596 = vmatmul.mubr.f32.gmra.mxu0 %v431
    %v597 = vpop.f32.mrf.mxu0
    %v598 = vadd.f32 %v370, %v597
    %v599 = vpop.f32.mrf.mxu0
    %600 = vmatprep.mubr.f32.mxu0 0.0
    %601 = vmatmul.mubr.f32.gmra.mxu0 %v433
    %v602 = vpop.f32.mrf.mxu0
    %v603 = vadd.f32 %v371, %v602
    %v604 = vpop.f32.mrf.mxu0
    %605 = vmatprep.mubr.f32.mxu0 0.0
    %606 = vmatmul.mubr.f32.gmra.mxu0 %v435
    %v607 = vpop.f32.mrf.mxu0
    %v608 = vadd.f32 %v372, %v607
    %v609 = vpop.f32.mrf.mxu0
    %610 = vmatprep.mubr.f32.mxu0 0.0
    %611 = vmatmul.mubr.f32.gmra.mxu0 %v437
    %v612 = vpop.f32.mrf.mxu0
    %v613 = vadd.f32 %v373, %v612
    %v614 = vpop.f32.mrf.mxu0
    %615 = vdwg.mxu0
    %616 = vrot.lane.b32.xlu0 %v263, 96
    %v617 = vpop.permute.xlu0 %616
    %618 = vrot.lane.b32.xlu0 %v265, 96
    %v619 = vpop.permute.xlu0 %618
    %620 = vrot.lane.b32.xlu0 %v267, 96
    %v621 = vpop.permute.xlu0 %620
    %622 = vrot.lane.b32.xlu0 %v269, 96
    %v623 = vpop.permute.xlu0 %622
    %624 = vrot.lane.b32.xlu0 %v271, 96
    %v625 = vpop.permute.xlu0 %624
    %626 = vrot.lane.b32.xlu0 %v273, 96
    %v627 = vpop.permute.xlu0 %626
    %628 = vrot.lane.b32.xlu0 %v275, 96
    %v629 = vpop.permute.xlu0 %628
    %630 = vrot.lane.b32.xlu0 %v277, 96
    %v631 = vpop.permute.xlu0 %630
    %632 = vrot.lane.b32.xlu0 %v279, 96
    %v633 = vpop.permute.xlu0 %632
    %634 = vrot.lane.b32.xlu0 %v281, 96
    %v635 = vpop.permute.xlu0 %634
    %636 = vrot.lane.b32.xlu0 %v283, 96
    %v637 = vpop.permute.xlu0 %636
    %638 = vrot.lane.b32.xlu0 %v285, 96
    %v639 = vpop.permute.xlu0 %638
    %640 = vrot.lane.b32.xlu0 %v287, 96
    %v641 = vpop.permute.xlu0 %640
    %642 = vrot.lane.b32.xlu0 %v289, 96
    %v643 = vpop.permute.xlu0 %642
    %644 = vrot.lane.b32.xlu0 %v291, 96
    %v645 = vpop.permute.xlu0 %644
    %646 = vrot.lane.b32.xlu0 %v293, 96
    %v647 = vpop.permute.xlu0 %646
    %v648 = vsel %vm406, %v263, 0
    %v650 = vsel %vm406, %v265, 0
    %v652 = vsel %vm406, %v267, 0
    %v654 = vsel %vm406, %v269, 0
    %v656 = vsel %vm406, %v271, 0
    %v658 = vsel %vm406, %v273, 0
    %v660 = vsel %vm406, %v275, 0
    %v662 = vsel %vm406, %v277, 0
    %v664 = vsel %vm406, %v279, 0
    %v666 = vsel %vm406, %v281, 0
    %v668 = vsel %vm406, %v283, 0
    %v670 = vsel %vm406, %v285, 0
    %v672 = vsel %vm406, %v287, 0
    %v674 = vsel %vm406, %v289, 0
    %v676 = vsel %vm406, %v291, 0
    %v678 = vsel %vm406, %v293, 0
    %v680 = vsel %vm406, %v617, 0
    %v682 = vsel %vm406, %v619, 0
    %v684 = vsel %vm406, %v621, 0
    %v686 = vsel %vm406, %v623, 0
    %v688 = vsel %vm406, %v625, 0
    %v690 = vsel %vm406, %v627, 0
    %v692 = vsel %vm406, %v629, 0
    %v694 = vsel %vm406, %v631, 0
    %v696 = vsel %vm406, %v633, 0
    %v698 = vsel %vm406, %v635, 0
    %v700 = vsel %vm406, %v637, 0
    %v702 = vsel %vm406, %v639, 0
    %v704 = vsel %vm406, %v641, 0
    %v706 = vsel %vm406, %v643, 0
    %v708 = vsel %vm406, %v645, 0
    %v710 = vsel %vm406, %v647, 0
    %712 = vmatprep.subr.mxu0 0.0
    %713 = vmatpush1.xpose.msra.mxu0 %v710
    %714 = vmatprep.subr.mxu0 0.0
    %715 = vmatpush1.xpose.msra.mxu0 %v708
    %716 = vmatprep.subr.mxu0 0.0
    %717 = vmatpush1.xpose.msra.mxu0 %v706
    %718 = vmatprep.subr.mxu0 0.0
    %719 = vmatpush1.xpose.msra.mxu0 %v704
    %720 = vmatprep.subr.mxu0 0.0
    %721 = vmatpush1.xpose.msra.mxu0 %v702
    %722 = vmatprep.subr.mxu0 0.0
    %723 = vmatpush1.xpose.msra.mxu0 %v700
    %724 = vmatprep.subr.mxu0 0.0
    %725 = vmatpush1.xpose.msra.mxu0 %v698
    %726 = vmatprep.subr.mxu0 0.0
    %727 = vmatpush1.xpose.msra.mxu0 %v696
    %728 = vmatprep.subr.mxu0 0.0
    %729 = vmatpush1.xpose.msra.mxu0 %v694
    %730 = vmatprep.subr.mxu0 0.0
    %731 = vmatpush1.xpose.msra.mxu0 %v692
    %732 = vmatprep.subr.mxu0 0.0
    %733 = vmatpush1.xpose.msra.mxu0 %v690
    %734 = vmatprep.subr.mxu0 0.0
    %735 = vmatpush1.xpose.msra.mxu0 %v688
    %736 = vmatprep.subr.mxu0 0.0
    %737 = vmatpush1.xpose.msra.mxu0 %v686
    %738 = vmatprep.subr.mxu0 0.0
    %739 = vmatpush1.xpose.msra.mxu0 %v684
    %740 = vmatprep.subr.mxu0 0.0
    %741 = vmatpush1.xpose.msra.mxu0 %v682
    %742 = vmatprep.subr.mxu0 0.0
    %743 = vmatpush1.xpose.msra.mxu0 %v680
    %744 = vmatprep.subr.mxu0 0.0
    %745 = vmatpush2.xpose.msra.mxu0 0.0
    %746 = vmatprep.subr.mxu0 0.0
    %747 = vmatpush2.xpose.msra.mxu0 0.0
    %748 = vmatprep.subr.mxu0 0.0
    %749 = vmatpush2.xpose.msra.mxu0 0.0
    %750 = vmatprep.subr.mxu0 0.0
    %751 = vmatpush2.xpose.msra.mxu0 0.0
    %752 = vmatprep.subr.mxu0 0.0
    %753 = vmatpush2.xpose.msra.mxu0 0.0
    %754 = vmatprep.subr.mxu0 0.0
    %755 = vmatpush2.xpose.msra.mxu0 0.0
    %756 = vmatprep.subr.mxu0 0.0
    %757 = vmatpush2.xpose.msra.mxu0 0.0
    %758 = vmatprep.subr.mxu0 0.0
    %759 = vmatpush2.xpose.msra.mxu0 0.0
    %760 = vmatprep.subr.mxu0 0.0
    %761 = vmatpush2.xpose.msra.mxu0 0.0
    %762 = vmatprep.subr.mxu0 0.0
    %763 = vmatpush2.xpose.msra.mxu0 0.0
    %764 = vmatprep.subr.mxu0 0.0
    %765 = vmatpush2.xpose.msra.mxu0 0.0
    %766 = vmatprep.subr.mxu0 0.0
    %767 = vmatpush2.xpose.msra.mxu0 0.0
    %768 = vmatprep.subr.mxu0 0.0
    %769 = vmatpush2.xpose.msra.mxu0 0.0
    %770 = vmatprep.subr.mxu0 0.0
    %771 = vmatpush2.xpose.msra.mxu0 0.0
    %772 = vmatprep.subr.mxu0 0.0
    %773 = vmatpush2.xpose.msra.mxu0 0.0
    %774 = vmatprep.subr.mxu0 0.0
    %775 = vmatpush2.xpose.msra.mxu0 0.0
    %776 = vmatprep.mubr.f32.mxu0 0.0
    %777 = vmatmul.mubr.f32.gmra.mxu0 %v648
    %v778 = vpop.f32.mrf.mxu0
    %v779 = vadd.f32 %v358, %v778
    %v780 = vpop.f32.mrf.mxu0
    %781 = vmatprep.mubr.f32.mxu0 0.0
    %782 = vmatmul.mubr.f32.gmra.mxu0 %v650
    %v783 = vpop.f32.mrf.mxu0
    %v784 = vadd.f32 %v359, %v783
    %v785 = vpop.f32.mrf.mxu0
    %786 = vmatprep.mubr.f32.mxu0 0.0
    %787 = vmatmul.mubr.f32.gmra.mxu0 %v652
    %v788 = vpop.f32.mrf.mxu0
    %v789 = vadd.f32 %v360, %v788
    %v790 = vpop.f32.mrf.mxu0
    %791 = vmatprep.mubr.f32.mxu0 0.0
    %792 = vmatmul.mubr.f32.gmra.mxu0 %v654
    %v793 = vpop.f32.mrf.mxu0
    %v794 = vadd.f32 %v361, %v793
    %v795 = vpop.f32.mrf.mxu0
    %796 = vmatprep.mubr.f32.mxu0 0.0
    %797 = vmatmul.mubr.f32.gmra.mxu0 %v656
    %v798 = vpop.f32.mrf.mxu0
    %v799 = vadd.f32 %v362, %v798
    %v800 = vpop.f32.mrf.mxu0
    %801 = vmatprep.mubr.f32.mxu0 0.0
    %802 = vmatmul.mubr.f32.gmra.mxu0 %v658
    %v803 = vpop.f32.mrf.mxu0
    %v804 = vadd.f32 %v363, %v803
    %v805 = vpop.f32.mrf.mxu0
    %806 = vmatprep.mubr.f32.mxu0 0.0
    %807 = vmatmul.mubr.f32.gmra.mxu0 %v660
    %v808 = vpop.f32.mrf.mxu0
    %v809 = vadd.f32 %v364, %v808
    %v810 = vpop.f32.mrf.mxu0
    %811 = vmatprep.mubr.f32.mxu0 0.0
    %812 = vmatmul.mubr.f32.gmra.mxu0 %v662
    %v813 = vpop.f32.mrf.mxu0
    %v814 = vadd.f32 %v365, %v813
    %v815 = vpop.f32.mrf.mxu0
    %816 = vmatprep.mubr.f32.mxu0 0.0
    %817 = vmatmul.mubr.f32.gmra.mxu0 %v664
    %v818 = vpop.f32.mrf.mxu0
    %v819 = vadd.f32 %v366, %v818
    %v820 = vpop.f32.mrf.mxu0
    %821 = vmatprep.mubr.f32.mxu0 0.0
    %822 = vmatmul.mubr.f32.gmra.mxu0 %v666
    %v823 = vpop.f32.mrf.mxu0
    %v824 = vadd.f32 %v367, %v823
    %v825 = vpop.f32.mrf.mxu0
    %826 = vmatprep.mubr.f32.mxu0 0.0
    %827 = vmatmul.mubr.f32.gmra.mxu0 %v668
    %v828 = vpop.f32.mrf.mxu0
    %v829 = vadd.f32 %v368, %v828
    %v830 = vpop.f32.mrf.mxu0
    %831 = vmatprep.mubr.f32.mxu0 0.0
    %832 = vmatmul.mubr.f32.gmra.mxu0 %v670
    %v833 = vpop.f32.mrf.mxu0
    %v834 = vadd.f32 %v369, %v833
    %v835 = vpop.f32.mrf.mxu0
    %836 = vmatprep.mubr.f32.mxu0 0.0
    %837 = vmatmul.mubr.f32.gmra.mxu0 %v672
    %v838 = vpop.f32.mrf.mxu0
    %v839 = vadd.f32 %v370, %v838
    %v840 = vpop.f32.mrf.mxu0
    %841 = vmatprep.mubr.f32.mxu0 0.0
    %842 = vmatmul.mubr.f32.gmra.mxu0 %v674
    %v843 = vpop.f32.mrf.mxu0
    %v844 = vadd.f32 %v371, %v843
    %v845 = vpop.f32.mrf.mxu0
    %846 = vmatprep.mubr.f32.mxu0 0.0
    %847 = vmatmul.mubr.f32.gmra.mxu0 %v676
    %v848 = vpop.f32.mrf.mxu0
    %v849 = vadd.f32 %v372, %v848
    %v850 = vpop.f32.mrf.mxu0
    %851 = vmatprep.mubr.f32.mxu0 0.0
    %852 = vmatmul.mubr.f32.gmra.mxu0 %v678
    %v853 = vpop.f32.mrf.mxu0
    %v854 = vadd.f32 %v373, %v853
    %v855 = vpop.f32.mrf.mxu0
    %856 = vdwg.mxu0
    %857 = vrot.lane.b32.xlu0 %v295, 96
    %v858 = vpop.permute.xlu0 %857
    %859 = vrot.lane.b32.xlu0 %v297, 96
    %v860 = vpop.permute.xlu0 %859
    %861 = vrot.lane.b32.xlu0 %v299, 96
    %v862 = vpop.permute.xlu0 %861
    %863 = vrot.lane.b32.xlu0 %v301, 96
    %v864 = vpop.permute.xlu0 %863
    %865 = vrot.lane.b32.xlu0 %v303, 96
    %v866 = vpop.permute.xlu0 %865
    %867 = vrot.lane.b32.xlu0 %v305, 96
    %v868 = vpop.permute.xlu0 %867
    %869 = vrot.lane.b32.xlu0 %v307, 96
    %v870 = vpop.permute.xlu0 %869
    %871 = vrot.lane.b32.xlu0 %v309, 96
    %v872 = vpop.permute.xlu0 %871
    %873 = vrot.lane.b32.xlu0 %v311, 96
    %v874 = vpop.permute.xlu0 %873
    %875 = vrot.lane.b32.xlu0 %v313, 96
    %v876 = vpop.permute.xlu0 %875
    %877 = vrot.lane.b32.xlu0 %v315, 96
    %v878 = vpop.permute.xlu0 %877
    %879 = vrot.lane.b32.xlu0 %v317, 96
    %v880 = vpop.permute.xlu0 %879
    %881 = vrot.lane.b32.xlu0 %v319, 96
    %v882 = vpop.permute.xlu0 %881
    %883 = vrot.lane.b32.xlu0 %v321, 96
    %v884 = vpop.permute.xlu0 %883
    %885 = vrot.lane.b32.xlu0 %v323, 96
    %v886 = vpop.permute.xlu0 %885
    %887 = vrot.lane.b32.xlu0 %v325, 96
    %v888 = vpop.permute.xlu0 %887
    %v889 = vsel %vm406, %v295, 0
    %v891 = vsel %vm406, %v297, 0
    %v893 = vsel %vm406, %v299, 0
    %v895 = vsel %vm406, %v301, 0
    %v897 = vsel %vm406, %v303, 0
    %v899 = vsel %vm406, %v305, 0
    %v901 = vsel %vm406, %v307, 0
    %v903 = vsel %vm406, %v309, 0
    %v905 = vsel %vm406, %v311, 0
    %v907 = vsel %vm406, %v313, 0
    %v909 = vsel %vm406, %v315, 0
    %v911 = vsel %vm406, %v317, 0
    %v913 = vsel %vm406, %v319, 0
    %v915 = vsel %vm406, %v321, 0
    %v917 = vsel %vm406, %v323, 0
    %v919 = vsel %vm406, %v325, 0
    %v921 = vsel %vm406, %v858, 0
    %v923 = vsel %vm406, %v860, 0
    %v925 = vsel %vm406, %v862, 0
    %v927 = vsel %vm406, %v864, 0
    %v929 = vsel %vm406, %v866, 0
    %v931 = vsel %vm406, %v868, 0
    %v933 = vsel %vm406, %v870, 0
    %v935 = vsel %vm406, %v872, 0
    %v937 = vsel %vm406, %v874, 0
    %v939 = vsel %vm406, %v876, 0
    %v941 = vsel %vm406, %v878, 0
    %v943 = vsel %vm406, %v880, 0
    %v945 = vsel %vm406, %v882, 0
    %v947 = vsel %vm406, %v884, 0
    %v949 = vsel %vm406, %v886, 0
    %v951 = vsel %vm406, %v888, 0
    %953 = vmatprep.subr.mxu0 0.0
    %954 = vmatpush1.xpose.msra.mxu0 %v951
    %955 = vmatprep.subr.mxu0 0.0
    %956 = vmatpush1.xpose.msra.mxu0 %v949
    %957 = vmatprep.subr.mxu0 0.0
    %958 = vmatpush1.xpose.msra.mxu0 %v947
    %959 = vmatprep.subr.mxu0 0.0
    %960 = vmatpush1.xpose.msra.mxu0 %v945
    %961 = vmatprep.subr.mxu0 0.0
    %962 = vmatpush1.xpose.msra.mxu0 %v943
    %963 = vmatprep.subr.mxu0 0.0
    %964 = vmatpush1.xpose.msra.mxu0 %v941
    %965 = vmatprep.subr.mxu0 0.0
    %966 = vmatpush1.xpose.msra.mxu0 %v939
    %967 = vmatprep.subr.mxu0 0.0
    %968 = vmatpush1.xpose.msra.mxu0 %v937
    %969 = vmatprep.subr.mxu0 0.0
    %970 = vmatpush1.xpose.msra.mxu0 %v935
    %971 = vmatprep.subr.mxu0 0.0
    %972 = vmatpush1.xpose.msra.mxu0 %v933
    %973 = vmatprep.subr.mxu0 0.0
    %974 = vmatpush1.xpose.msra.mxu0 %v931
    %975 = vmatprep.subr.mxu0 0.0
    %976 = vmatpush1.xpose.msra.mxu0 %v929
    %977 = vmatprep.subr.mxu0 0.0
    %978 = vmatpush1.xpose.msra.mxu0 %v927
    %979 = vmatprep.subr.mxu0 0.0
    %980 = vmatpush1.xpose.msra.mxu0 %v925
    %981 = vmatprep.subr.mxu0 0.0
    %982 = vmatpush1.xpose.msra.mxu0 %v923
    %983 = vmatprep.subr.mxu0 0.0
    %984 = vmatpush1.xpose.msra.mxu0 %v921
    %985 = vmatprep.subr.mxu0 0.0
    %986 = vmatpush2.xpose.msra.mxu0 0.0
    %987 = vmatprep.subr.mxu0 0.0
    %988 = vmatpush2.xpose.msra.mxu0 0.0
    %989 = vmatprep.subr.mxu0 0.0
    %990 = vmatpush2.xpose.msra.mxu0 0.0
    %991 = vmatprep.subr.mxu0 0.0
    %992 = vmatpush2.xpose.msra.mxu0 0.0
    %993 = vmatprep.subr.mxu0 0.0
    %994 = vmatpush2.xpose.msra.mxu0 0.0
    %995 = vmatprep.subr.mxu0 0.0
    %996 = vmatpush2.xpose.msra.mxu0 0.0
    %997 = vmatprep.subr.mxu0 0.0
    %998 = vmatpush2.xpose.msra.mxu0 0.0
    %999 = vmatprep.subr.mxu0 0.0
    %1000 = vmatpush2.xpose.msra.mxu0 0.0
    %1001 = vmatprep.subr.mxu0 0.0
    %1002 = vmatpush2.xpose.msra.mxu0 0.0
    %1003 = vmatprep.subr.mxu0 0.0
    %1004 = vmatpush2.xpose.msra.mxu0 0.0
    %1005 = vmatprep.subr.mxu0 0.0
    %1006 = vmatpush2.xpose.msra.mxu0 0.0
    %1007 = vmatprep.subr.mxu0 0.0
    %1008 = vmatpush2.xpose.msra.mxu0 0.0
    %1009 = vmatprep.subr.mxu0 0.0
    %1010 = vmatpush2.xpose.msra.mxu0 0.0
    %1011 = vmatprep.subr.mxu0 0.0
    %1012 = vmatpush2.xpose.msra.mxu0 0.0
    %1013 = vmatprep.subr.mxu0 0.0
    %1014 = vmatpush2.xpose.msra.mxu0 0.0
    %1015 = vmatprep.subr.mxu0 0.0
    %1016 = vmatpush2.xpose.msra.mxu0 0.0
    %1017 = vmatprep.mubr.f32.mxu0 0.0
    %1018 = vmatmul.mubr.f32.gmra.mxu0 %v889
    %v1019 = vpop.f32.mrf.mxu0
    %v1020 = vadd.f32 %v358, %v1019
    %v1021 = vpop.f32.mrf.mxu0
    %1022 = vmatprep.mubr.f32.mxu0 0.0
    %1023 = vmatmul.mubr.f32.gmra.mxu0 %v891
    %v1024 = vpop.f32.mrf.mxu0
    %v1025 = vadd.f32 %v359, %v1024
    %v1026 = vpop.f32.mrf.mxu0
    %1027 = vmatprep.mubr.f32.mxu0 0.0
    %1028 = vmatmul.mubr.f32.gmra.mxu0 %v893
    %v1029 = vpop.f32.mrf.mxu0
    %v1030 = vadd.f32 %v360, %v1029
    %v1031 = vpop.f32.mrf.mxu0
    %1032 = vmatprep.mubr.f32.mxu0 0.0
    %1033 = vmatmul.mubr.f32.gmra.mxu0 %v895
    %v1034 = vpop.f32.mrf.mxu0
    %v1035 = vadd.f32 %v361, %v1034
    %v1036 = vpop.f32.mrf.mxu0
    %1037 = vmatprep.mubr.f32.mxu0 0.0
    %1038 = vmatmul.mubr.f32.gmra.mxu0 %v897
    %v1039 = vpop.f32.mrf.mxu0
    %v1040 = vadd.f32 %v362, %v1039
    %v1041 = vpop.f32.mrf.mxu0
    %1042 = vmatprep.mubr.f32.mxu0 0.0
    %1043 = vmatmul.mubr.f32.gmra.mxu0 %v899
    %v1044 = vpop.f32.mrf.mxu0
    %v1045 = vadd.f32 %v363, %v1044
    %v1046 = vpop.f32.mrf.mxu0
    %1047 = vmatprep.mubr.f32.mxu0 0.0
    %1048 = vmatmul.mubr.f32.gmra.mxu0 %v901
    %v1049 = vpop.f32.mrf.mxu0
    %v1050 = vadd.f32 %v364, %v1049
    %v1051 = vpop.f32.mrf.mxu0
    %1052 = vmatprep.mubr.f32.mxu0 0.0
    %1053 = vmatmul.mubr.f32.gmra.mxu0 %v903
    %v1054 = vpop.f32.mrf.mxu0
    %v1055 = vadd.f32 %v365, %v1054
    %v1056 = vpop.f32.mrf.mxu0
    %1057 = vmatprep.mubr.f32.mxu0 0.0
    %1058 = vmatmul.mubr.f32.gmra.mxu0 %v905
    %v1059 = vpop.f32.mrf.mxu0
    %v1060 = vadd.f32 %v366, %v1059
    %v1061 = vpop.f32.mrf.mxu0
    %1062 = vmatprep.mubr.f32.mxu0 0.0
    %1063 = vmatmul.mubr.f32.gmra.mxu0 %v907
    %v1064 = vpop.f32.mrf.mxu0
    %v1065 = vadd.f32 %v367, %v1064
    %v1066 = vpop.f32.mrf.mxu0
    %1067 = vmatprep.mubr.f32.mxu0 0.0
    %1068 = vmatmul.mubr.f32.gmra.mxu0 %v909
    %v1069 = vpop.f32.mrf.mxu0
    %v1070 = vadd.f32 %v368, %v1069
    %v1071 = vpop.f32.mrf.mxu0
    %1072 = vmatprep.mubr.f32.mxu0 0.0
    %1073 = vmatmul.mubr.f32.gmra.mxu0 %v911
    %v1074 = vpop.f32.mrf.mxu0
    %v1075 = vadd.f32 %v369, %v1074
    %v1076 = vpop.f32.mrf.mxu0
    %1077 = vmatprep.mubr.f32.mxu0 0.0
    %1078 = vmatmul.mubr.f32.gmra.mxu0 %v913
    %v1079 = vpop.f32.mrf.mxu0
    %v1080 = vadd.f32 %v370, %v1079
    %v1081 = vpop.f32.mrf.mxu0
    %1082 = vmatprep.mubr.f32.mxu0 0.0
    %1083 = vmatmul.mubr.f32.gmra.mxu0 %v915
    %v1084 = vpop.f32.mrf.mxu0
    %v1085 = vadd.f32 %v371, %v1084
    %v1086 = vpop.f32.mrf.mxu0
    %1087 = vmatprep.mubr.f32.mxu0 0.0
    %1088 = vmatmul.mubr.f32.gmra.mxu0 %v917
    %v1089 = vpop.f32.mrf.mxu0
    %v1090 = vadd.f32 %v372, %v1089
    %v1091 = vpop.f32.mrf.mxu0
    %1092 = vmatprep.mubr.f32.mxu0 0.0
    %1093 = vmatmul.mubr.f32.gmra.mxu0 %v919
    %v1094 = vpop.f32.mrf.mxu0
    %v1095 = vadd.f32 %v373, %v1094
    %v1096 = vpop.f32.mrf.mxu0
    %1097 = vdwg.mxu0
    %1098 = vrot.lane.b32.xlu0 %v327, 96
    %v1099 = vpop.permute.xlu0 %1098
    %1100 = vrot.lane.b32.xlu0 %v329, 96
    %v1101 = vpop.permute.xlu0 %1100
    %1102 = vrot.lane.b32.xlu0 %v331, 96
    %v1103 = vpop.permute.xlu0 %1102
    %1104 = vrot.lane.b32.xlu0 %v333, 96
    %v1105 = vpop.permute.xlu0 %1104
    %1106 = vrot.lane.b32.xlu0 %v335, 96
    %v1107 = vpop.permute.xlu0 %1106
    %1108 = vrot.lane.b32.xlu0 %v337, 96
    %v1109 = vpop.permute.xlu0 %1108
    %1110 = vrot.lane.b32.xlu0 %v339, 96
    %v1111 = vpop.permute.xlu0 %1110
    %1112 = vrot.lane.b32.xlu0 %v341, 96
    %v1113 = vpop.permute.xlu0 %1112
    %1114 = vrot.lane.b32.xlu0 %v343, 96
    %v1115 = vpop.permute.xlu0 %1114
    %1116 = vrot.lane.b32.xlu0 %v345, 96
    %v1117 = vpop.permute.xlu0 %1116
    %1118 = vrot.lane.b32.xlu0 %v347, 96
    %v1119 = vpop.permute.xlu0 %1118
    %1120 = vrot.lane.b32.xlu0 %v349, 96
    %v1121 = vpop.permute.xlu0 %1120
    %1122 = vrot.lane.b32.xlu0 %v351, 96
    %v1123 = vpop.permute.xlu0 %1122
    %1124 = vrot.lane.b32.xlu0 %v353, 96
    %v1125 = vpop.permute.xlu0 %1124
    %1126 = vrot.lane.b32.xlu0 %v355, 96
    %v1127 = vpop.permute.xlu0 %1126
    %1128 = vrot.lane.b32.xlu0 %v357, 96
    %v1129 = vpop.permute.xlu0 %1128
    %v1130 = vsel %vm406, %v327, 0
    %v1132 = vsel %vm406, %v329, 0
    %v1134 = vsel %vm406, %v331, 0
    %v1136 = vsel %vm406, %v333, 0
    %v1138 = vsel %vm406, %v335, 0
    %v1140 = vsel %vm406, %v337, 0
    %v1142 = vsel %vm406, %v339, 0
    %v1144 = vsel %vm406, %v341, 0
    %v1146 = vsel %vm406, %v343, 0
    %v1148 = vsel %vm406, %v345, 0
    %v1150 = vsel %vm406, %v347, 0
    %v1152 = vsel %vm406, %v349, 0
    %v1154 = vsel %vm406, %v351, 0
    %v1156 = vsel %vm406, %v353, 0
    %v1158 = vsel %vm406, %v355, 0
    %v1160 = vsel %vm406, %v357, 0
    %v1162 = vsel %vm406, %v1099, 0
    %v1164 = vsel %vm406, %v1101, 0
    %v1166 = vsel %vm406, %v1103, 0
    %v1168 = vsel %vm406, %v1105, 0
    %v1170 = vsel %vm406, %v1107, 0
    %v1172 = vsel %vm406, %v1109, 0
    %v1174 = vsel %vm406, %v1111, 0
    %v1176 = vsel %vm406, %v1113, 0
    %v1178 = vsel %vm406, %v1115, 0
    %v1180 = vsel %vm406, %v1117, 0
    %v1182 = vsel %vm406, %v1119, 0
    %v1184 = vsel %vm406, %v1121, 0
    %v1186 = vsel %vm406, %v1123, 0
    %v1188 = vsel %vm406, %v1125, 0
    %v1190 = vsel %vm406, %v1127, 0
    %v1192 = vsel %vm406, %v1129, 0
    %1194 = vmatprep.subr.mxu0 0.0
    %1195 = vmatpush1.xpose.msra.mxu0 %v1192
    %1196 = vmatprep.subr.mxu0 0.0
    %1197 = vmatpush1.xpose.msra.mxu0 %v1190
    %1198 = vmatprep.subr.mxu0 0.0
    %1199 = vmatpush1.xpose.msra.mxu0 %v1188
    %1200 = vmatprep.subr.mxu0 0.0
    %1201 = vmatpush1.xpose.msra.mxu0 %v1186
    %1202 = vmatprep.subr.mxu0 0.0
    %1203 = vmatpush1.xpose.msra.mxu0 %v1184
    %1204 = vmatprep.subr.mxu0 0.0
    %1205 = vmatpush1.xpose.msra.mxu0 %v1182
    %1206 = vmatprep.subr.mxu0 0.0
    %1207 = vmatpush1.xpose.msra.mxu0 %v1180
    %1208 = vmatprep.subr.mxu0 0.0
    %1209 = vmatpush1.xpose.msra.mxu0 %v1178
    %1210 = vmatprep.subr.mxu0 0.0
    %1211 = vmatpush1.xpose.msra.mxu0 %v1176
    %1212 = vmatprep.subr.mxu0 0.0
    %1213 = vmatpush1.xpose.msra.mxu0 %v1174
    %1214 = vmatprep.subr.mxu0 0.0
    %1215 = vmatpush1.xpose.msra.mxu0 %v1172
    %1216 = vmatprep.subr.mxu0 0.0
    %1217 = vmatpush1.xpose.msra.mxu0 %v1170
    %1218 = vmatprep.subr.mxu0 0.0
    %1219 = vmatpush1.xpose.msra.mxu0 %v1168
    %1220 = vmatprep.subr.mxu0 0.0
    %1221 = vmatpush1.xpose.msra.mxu0 %v1166
    %1222 = vmatprep.subr.mxu0 0.0
    %1223 = vmatpush1.xpose.msra.mxu0 %v1164
    %1224 = vmatprep.subr.mxu0 0.0
    %1225 = vmatpush1.xpose.msra.mxu0 %v1162
    %1226 = vmatprep.subr.mxu0 0.0
    %1227 = vmatpush2.xpose.msra.mxu0 0.0
    %1228 = vmatprep.subr.mxu0 0.0
    %1229 = vmatpush2.xpose.msra.mxu0 0.0
    %1230 = vmatprep.subr.mxu0 0.0
    %1231 = vmatpush2.xpose.msra.mxu0 0.0
    %1232 = vmatprep.subr.mxu0 0.0
    %1233 = vmatpush2.xpose.msra.mxu0 0.0
    %1234 = vmatprep.subr.mxu0 0.0
    %1235 = vmatpush2.xpose.msra.mxu0 0.0
    %1236 = vmatprep.subr.mxu0 0.0
    %1237 = vmatpush2.xpose.msra.mxu0 0.0
    %1238 = vmatprep.subr.mxu0 0.0
    %1239 = vmatpush2.xpose.msra.mxu0 0.0
    %1240 = vmatprep.subr.mxu0 0.0
    %1241 = vmatpush2.xpose.msra.mxu0 0.0
    %1242 = vmatprep.subr.mxu0 0.0
    %1243 = vmatpush2.xpose.msra.mxu0 0.0
    %1244 = vmatprep.subr.mxu0 0.0
    %1245 = vmatpush2.xpose.msra.mxu0 0.0
    %1246 = vmatprep.subr.mxu0 0.0
    %1247 = vmatpush2.xpose.msra.mxu0 0.0
    %1248 = vmatprep.subr.mxu0 0.0
    %1249 = vmatpush2.xpose.msra.mxu0 0.0
    %1250 = vmatprep.subr.mxu0 0.0
    %1251 = vmatpush2.xpose.msra.mxu0 0.0
    %1252 = vmatprep.subr.mxu0 0.0
    %1253 = vmatpush2.xpose.msra.mxu0 0.0
    %1254 = vmatprep.subr.mxu0 0.0
    %1255 = vmatpush2.xpose.msra.mxu0 0.0
    %1256 = vmatprep.subr.mxu0 0.0
    %1257 = vmatpush2.xpose.msra.mxu0 0.0
    %1258 = vmatprep.mubr.f32.mxu0 0.0
    %1259 = vmatmul.mubr.f32.gmra.mxu0 %v1130
    %v1260 = vpop.f32.mrf.mxu0
    %v1261 = vadd.f32 %v358, %v1260
    %v1262 = vpop.f32.mrf.mxu0
    %1263 = vmatprep.mubr.f32.mxu0 0.0
    %1264 = vmatmul.mubr.f32.gmra.mxu0 %v1132
    %v1265 = vpop.f32.mrf.mxu0
    %v1266 = vadd.f32 %v359, %v1265
    %v1267 = vpop.f32.mrf.mxu0
    %1268 = vmatprep.mubr.f32.mxu0 0.0
    %1269 = vmatmul.mubr.f32.gmra.mxu0 %v1134
    %v1270 = vpop.f32.mrf.mxu0
    %v1271 = vadd.f32 %v360, %v1270
    %v1272 = vpop.f32.mrf.mxu0
    %1273 = vmatprep.mubr.f32.mxu0 0.0
    %1274 = vmatmul.mubr.f32.gmra.mxu0 %v1136
    %v1275 = vpop.f32.mrf.mxu0
    %v1276 = vadd.f32 %v361, %v1275
    %v1277 = vpop.f32.mrf.mxu0
    %1278 = vmatprep.mubr.f32.mxu0 0.0
    %1279 = vmatmul.mubr.f32.gmra.mxu0 %v1138
    %v1280 = vpop.f32.mrf.mxu0
    %v1281 = vadd.f32 %v362, %v1280
    %v1282 = vpop.f32.mrf.mxu0
    %1283 = vmatprep.mubr.f32.mxu0 0.0
    %1284 = vmatmul.mubr.f32.gmra.mxu0 %v1140
    %v1285 = vpop.f32.mrf.mxu0
    %v1286 = vadd.f32 %v363, %v1285
    %v1287 = vpop.f32.mrf.mxu0
    %1288 = vmatprep.mubr.f32.mxu0 0.0
    %1289 = vmatmul.mubr.f32.gmra.mxu0 %v1142
    %v1290 = vpop.f32.mrf.mxu0
    %v1291 = vadd.f32 %v364, %v1290
    %v1292 = vpop.f32.mrf.mxu0
    %1293 = vmatprep.mubr.f32.mxu0 0.0
    %1294 = vmatmul.mubr.f32.gmra.mxu0 %v1144
    %v1295 = vpop.f32.mrf.mxu0
    %v1296 = vadd.f32 %v365, %v1295
    %v1297 = vpop.f32.mrf.mxu0
    %1298 = vmatprep.mubr.f32.mxu0 0.0
    %1299 = vmatmul.mubr.f32.gmra.mxu0 %v1146
    %v1300 = vpop.f32.mrf.mxu0
    %v1301 = vadd.f32 %v366, %v1300
    %v1302 = vpop.f32.mrf.mxu0
    %1303 = vmatprep.mubr.f32.mxu0 0.0
    %1304 = vmatmul.mubr.f32.gmra.mxu0 %v1148
    %v1305 = vpop.f32.mrf.mxu0
    %v1306 = vadd.f32 %v367, %v1305
    %v1307 = vpop.f32.mrf.mxu0
    %1308 = vmatprep.mubr.f32.mxu0 0.0
    %1309 = vmatmul.mubr.f32.gmra.mxu0 %v1150
    %v1310 = vpop.f32.mrf.mxu0
    %v1311 = vadd.f32 %v368, %v1310
    %v1312 = vpop.f32.mrf.mxu0
    %1313 = vmatprep.mubr.f32.mxu0 0.0
    %1314 = vmatmul.mubr.f32.gmra.mxu0 %v1152
    %v1315 = vpop.f32.mrf.mxu0
    %v1316 = vadd.f32 %v369, %v1315
    %v1317 = vpop.f32.mrf.mxu0
    %1318 = vmatprep.mubr.f32.mxu0 0.0
    %1319 = vmatmul.mubr.f32.gmra.mxu0 %v1154
    %v1320 = vpop.f32.mrf.mxu0
    %v1321 = vadd.f32 %v370, %v1320
    %v1322 = vpop.f32.mrf.mxu0
    %1323 = vmatprep.mubr.f32.mxu0 0.0
    %1324 = vmatmul.mubr.f32.gmra.mxu0 %v1156
    %v1325 = vpop.f32.mrf.mxu0
    %v1326 = vadd.f32 %v371, %v1325
    %v1327 = vpop.f32.mrf.mxu0
    %1328 = vmatprep.mubr.f32.mxu0 0.0
    %1329 = vmatmul.mubr.f32.gmra.mxu0 %v1158
    %v1330 = vpop.f32.mrf.mxu0
    %v1331 = vadd.f32 %v372, %v1330
    %v1332 = vpop.f32.mrf.mxu0
    %1333 = vmatprep.mubr.f32.mxu0 0.0
    %1334 = vmatmul.mubr.f32.gmra.mxu0 %v1160
    %v1335 = vpop.f32.mrf.mxu0
    %v1336 = vadd.f32 %v373, %v1335
    %v1337 = vpop.f32.mrf.mxu0
    %1338 = vdwg.mxu0
    %1339 = vmax.xlane.f32.xlu0 %v538
    %v1340 = vpop.xlane.xlu0 %1339
    %1341 = vmax.xlane.f32.xlu0 %v543
    %v1342 = vpop.xlane.xlu0 %1341
    %1343 = vmax.xlane.f32.xlu0 %v548
    %v1344 = vpop.xlane.xlu0 %1343
    %1345 = vmax.xlane.f32.xlu0 %v553
    %v1346 = vpop.xlane.xlu0 %1345
    %1347 = vmax.xlane.f32.xlu0 %v558
    %v1348 = vpop.xlane.xlu0 %1347
    %1349 = vmax.xlane.f32.xlu0 %v563
    %v1350 = vpop.xlane.xlu0 %1349
    %1351 = vmax.xlane.f32.xlu0 %v568
    %v1352 = vpop.xlane.xlu0 %1351
    %1353 = vmax.xlane.f32.xlu0 %v573
    %v1354 = vpop.xlane.xlu0 %1353
    %1355 = vmax.xlane.f32.xlu0 %v578
    %v1356 = vpop.xlane.xlu0 %1355
    %1357 = vmax.xlane.f32.xlu0 %v583
    %v1358 = vpop.xlane.xlu0 %1357
    %1359 = vmax.xlane.f32.xlu0 %v588
    %v1360 = vpop.xlane.xlu0 %1359
    %1361 = vmax.xlane.f32.xlu0 %v593
    %v1362 = vpop.xlane.xlu0 %1361
    %1363 = vmax.xlane.f32.xlu0 %v598
    %v1364 = vpop.xlane.xlu0 %1363
    %1365 = vmax.xlane.f32.xlu0 %v603
    %v1366 = vpop.xlane.xlu0 %1365
    %1367 = vmax.xlane.f32.xlu0 %v608
    %v1368 = vpop.xlane.xlu0 %1367
    %1369 = vmax.xlane.f32.xlu0 %v613
    %v1370 = vpop.xlane.xlu0 %1369
    %1371 = vmax.xlane.f32.xlu0 %v779
    %v1372 = vpop.xlane.xlu0 %1371
    %1373 = vmax.xlane.f32.xlu0 %v784
    %v1374 = vpop.xlane.xlu0 %1373
    %1375 = vmax.xlane.f32.xlu0 %v789
    %v1376 = vpop.xlane.xlu0 %1375
    %1377 = vmax.xlane.f32.xlu0 %v794
    %v1378 = vpop.xlane.xlu0 %1377
    %1379 = vmax.xlane.f32.xlu0 %v799
    %v1380 = vpop.xlane.xlu0 %1379
    %1381 = vmax.xlane.f32.xlu0 %v804
    %v1382 = vpop.xlane.xlu0 %1381
    %1383 = vmax.xlane.f32.xlu0 %v809
    %v1384 = vpop.xlane.xlu0 %1383
    %1385 = vmax.xlane.f32.xlu0 %v814
    %v1386 = vpop.xlane.xlu0 %1385
    %1387 = vmax.xlane.f32.xlu0 %v819
    %v1388 = vpop.xlane.xlu0 %1387
    %1389 = vmax.xlane.f32.xlu0 %v824
    %v1390 = vpop.xlane.xlu0 %1389
    %1391 = vmax.xlane.f32.xlu0 %v829
    %v1392 = vpop.xlane.xlu0 %1391
    %1393 = vmax.xlane.f32.xlu0 %v834
    %v1394 = vpop.xlane.xlu0 %1393
    %1395 = vmax.xlane.f32.xlu0 %v839
    %v1396 = vpop.xlane.xlu0 %1395
    %1397 = vmax.xlane.f32.xlu0 %v844
    %v1398 = vpop.xlane.xlu0 %1397
    %1399 = vmax.xlane.f32.xlu0 %v849
    %v1400 = vpop.xlane.xlu0 %1399
    %1401 = vmax.xlane.f32.xlu0 %v854
    %v1402 = vpop.xlane.xlu0 %1401
    %1403 = vmax.xlane.f32.xlu0 %v1020
    %v1404 = vpop.xlane.xlu0 %1403
    %1405 = vmax.xlane.f32.xlu0 %v1025
    %v1406 = vpop.xlane.xlu0 %1405
    %1407 = vmax.xlane.f32.xlu0 %v1030
    %v1408 = vpop.xlane.xlu0 %1407
    %1409 = vmax.xlane.f32.xlu0 %v1035
    %v1410 = vpop.xlane.xlu0 %1409
    %1411 = vmax.xlane.f32.xlu0 %v1040
    %v1412 = vpop.xlane.xlu0 %1411
    %1413 = vmax.xlane.f32.xlu0 %v1045
    %v1414 = vpop.xlane.xlu0 %1413
    %1415 = vmax.xlane.f32.xlu0 %v1050
    %v1416 = vpop.xlane.xlu0 %1415
    %1417 = vmax.xlane.f32.xlu0 %v1055
    %v1418 = vpop.xlane.xlu0 %1417
    %1419 = vmax.xlane.f32.xlu0 %v1060
    %v1420 = vpop.xlane.xlu0 %1419
    %1421 = vmax.xlane.f32.xlu0 %v1065
    %v1422 = vpop.xlane.xlu0 %1421
    %1423 = vmax.xlane.f32.xlu0 %v1070
    %v1424 = vpop.xlane.xlu0 %1423
    %1425 = vmax.xlane.f32.xlu0 %v1075
    %v1426 = vpop.xlane.xlu0 %1425
    %1427 = vmax.xlane.f32.xlu0 %v1080
    %v1428 = vpop.xlane.xlu0 %1427
    %1429 = vmax.xlane.f32.xlu0 %v1085
    %v1430 = vpop.xlane.xlu0 %1429
    %1431 = vmax.xlane.f32.xlu0 %v1090
    %v1432 = vpop.xlane.xlu0 %1431
    %1433 = vmax.xlane.f32.xlu0 %v1095
    %v1434 = vpop.xlane.xlu0 %1433
    %1435 = vmax.xlane.f32.xlu0 %v1261
    %v1436 = vpop.xlane.xlu0 %1435
    %1437 = vmax.xlane.f32.xlu0 %v1266
    %v1438 = vpop.xlane.xlu0 %1437
    %1439 = vmax.xlane.f32.xlu0 %v1271
    %v1440 = vpop.xlane.xlu0 %1439
    %1441 = vmax.xlane.f32.xlu0 %v1276
    %v1442 = vpop.xlane.xlu0 %1441
    %1443 = vmax.xlane.f32.xlu0 %v1281
    %v1444 = vpop.xlane.xlu0 %1443
    %1445 = vmax.xlane.f32.xlu0 %v1286
    %v1446 = vpop.xlane.xlu0 %1445
    %1447 = vmax.xlane.f32.xlu0 %v1291
    %v1448 = vpop.xlane.xlu0 %1447
    %1449 = vmax.xlane.f32.xlu0 %v1296
    %v1450 = vpop.xlane.xlu0 %1449
    %1451 = vmax.xlane.f32.xlu0 %v1301
    %v1452 = vpop.xlane.xlu0 %1451
    %1453 = vmax.xlane.f32.xlu0 %v1306
    %v1454 = vpop.xlane.xlu0 %1453
    %1455 = vmax.xlane.f32.xlu0 %v1311
    %v1456 = vpop.xlane.xlu0 %1455
    %1457 = vmax.xlane.f32.xlu0 %v1316
    %v1458 = vpop.xlane.xlu0 %1457
    %1459 = vmax.xlane.f32.xlu0 %v1321
    %v1460 = vpop.xlane.xlu0 %1459
    %1461 = vmax.xlane.f32.xlu0 %v1326
    %v1462 = vpop.xlane.xlu0 %1461
    %1463 = vmax.xlane.f32.xlu0 %v1331
    %v1464 = vpop.xlane.xlu0 %1463
    %1465 = vmax.xlane.f32.xlu0 %v1336
    %v1466 = vpop.xlane.xlu0 %1465
    %v1467 = vsub.f32 %v538, %v1340
    %v1468 = vsub.f32 %v543, %v1342
    %v1469 = vsub.f32 %v548, %v1344
    %v1470 = vsub.f32 %v553, %v1346
    %v1471 = vsub.f32 %v558, %v1348
    %v1472 = vsub.f32 %v563, %v1350
    %v1473 = vsub.f32 %v568, %v1352
    %v1474 = vsub.f32 %v573, %v1354
    %v1475 = vsub.f32 %v578, %v1356
    %v1476 = vsub.f32 %v583, %v1358
    %v1477 = vsub.f32 %v588, %v1360
    %v1478 = vsub.f32 %v593, %v1362
    %v1479 = vsub.f32 %v598, %v1364
    %v1480 = vsub.f32 %v603, %v1366
    %v1481 = vsub.f32 %v608, %v1368
    %v1482 = vsub.f32 %v613, %v1370
    %v1483 = vsub.f32 %v779, %v1372
    %v1484 = vsub.f32 %v784, %v1374
    %v1485 = vsub.f32 %v789, %v1376
    %v1486 = vsub.f32 %v794, %v1378
    %v1487 = vsub.f32 %v799, %v1380
    %v1488 = vsub.f32 %v804, %v1382
    %v1489 = vsub.f32 %v809, %v1384
    %v1490 = vsub.f32 %v814, %v1386
    %v1491 = vsub.f32 %v819, %v1388
    %v1492 = vsub.f32 %v824, %v1390
    %v1493 = vsub.f32 %v829, %v1392
    %v1494 = vsub.f32 %v834, %v1394
    %v1495 = vsub.f32 %v839, %v1396
    %v1496 = vsub.f32 %v844, %v1398
    %v1497 = vsub.f32 %v849, %v1400
    %v1498 = vsub.f32 %v854, %v1402
    %v1499 = vsub.f32 %v1020, %v1404
    %v1500 = vsub.f32 %v1025, %v1406
    %v1501 = vsub.f32 %v1030, %v1408
    %v1502 = vsub.f32 %v1035, %v1410
    %v1503 = vsub.f32 %v1040, %v1412
    %v1504 = vsub.f32 %v1045, %v1414
    %v1505 = vsub.f32 %v1050, %v1416
    %v1506 = vsub.f32 %v1055, %v1418
    %v1507 = vsub.f32 %v1060, %v1420
    %v1508 = vsub.f32 %v1065, %v1422
    %v1509 = vsub.f32 %v1070, %v1424
    %v1510 = vsub.f32 %v1075, %v1426
    %v1511 = vsub.f32 %v1080, %v1428
    %v1512 = vsub.f32 %v1085, %v1430
    %v1513 = vsub.f32 %v1090, %v1432
    %v1514 = vsub.f32 %v1095, %v1434
    %v1515 = vsub.f32 %v1261, %v1436
    %v1516 = vsub.f32 %v1266, %v1438
    %v1517 = vsub.f32 %v1271, %v1440
    %v1518 = vsub.f32 %v1276, %v1442
    %v1519 = vsub.f32 %v1281, %v1444
    %v1520 = vsub.f32 %v1286, %v1446
    %v1521 = vsub.f32 %v1291, %v1448
    %v1522 = vsub.f32 %v1296, %v1450
    %v1523 = vsub.f32 %v1301, %v1452
    %v1524 = vsub.f32 %v1306, %v1454
    %v1525 = vsub.f32 %v1311, %v1456
    %v1526 = vsub.f32 %v1316, %v1458
    %v1527 = vsub.f32 %v1321, %v1460
    %v1528 = vsub.f32 %v1326, %v1462
    %v1529 = vsub.f32 %v1331, %v1464
    %v1530 = vsub.f32 %v1336, %v1466
    %v1531 = vmul.f32 %v1467, 1.442695
    %v1532 = vpow.pop %v1531
    %v1533 = vmul.f32 %v1468, 1.442695
    %v1534 = vpow.pop %v1533
    %v1535 = vmul.f32 %v1469, 1.442695
    %v1536 = vpow.pop %v1535
    %v1537 = vmul.f32 %v1470, 1.442695
    %v1538 = vpow.pop %v1537
    %v1539 = vmul.f32 %v1471, 1.442695
    %v1540 = vpow.pop %v1539
    %v1541 = vmul.f32 %v1472, 1.442695
    %v1542 = vpow.pop %v1541
    %v1543 = vmul.f32 %v1473, 1.442695
    %v1544 = vpow.pop %v1543
    %v1545 = vmul.f32 %v1474, 1.442695
    %v1546 = vpow.pop %v1545
    %v1547 = vmul.f32 %v1475, 1.442695
    %v1548 = vpow.pop %v1547
    %v1549 = vmul.f32 %v1476, 1.442695
    %v1550 = vpow.pop %v1549
    %v1551 = vmul.f32 %v1477, 1.442695
    %v1552 = vpow.pop %v1551
    %v1553 = vmul.f32 %v1478, 1.442695
    %v1554 = vpow.pop %v1553
    %v1555 = vmul.f32 %v1479, 1.442695
    %v1556 = vpow.pop %v1555
    %v1557 = vmul.f32 %v1480, 1.442695
    %v1558 = vpow.pop %v1557
    %v1559 = vmul.f32 %v1481, 1.442695
    %v1560 = vpow.pop %v1559
    %v1561 = vmul.f32 %v1482, 1.442695
    %v1562 = vpow.pop %v1561
    %v1563 = vmul.f32 %v1483, 1.442695
    %v1564 = vpow.pop %v1563
    %v1565 = vmul.f32 %v1484, 1.442695
    %v1566 = vpow.pop %v1565
    %v1567 = vmul.f32 %v1485, 1.442695
    %v1568 = vpow.pop %v1567
    %v1569 = vmul.f32 %v1486, 1.442695
    %v1570 = vpow.pop %v1569
    %v1571 = vmul.f32 %v1487, 1.442695
    %v1572 = vpow.pop %v1571
    %v1573 = vmul.f32 %v1488, 1.442695
    %v1574 = vpow.pop %v1573
    %v1575 = vmul.f32 %v1489, 1.442695
    %v1576 = vpow.pop %v1575
    %v1577 = vmul.f32 %v1490, 1.442695
    %v1578 = vpow.pop %v1577
    %v1579 = vmul.f32 %v1491, 1.442695
    %v1580 = vpow.pop %v1579
    %v1581 = vmul.f32 %v1492, 1.442695
    %v1582 = vpow.pop %v1581
    %v1583 = vmul.f32 %v1493, 1.442695
    %v1584 = vpow.pop %v1583
    %v1585 = vmul.f32 %v1494, 1.442695
    %v1586 = vpow.pop %v1585
    %v1587 = vmul.f32 %v1495, 1.442695
    %v1588 = vpow.pop %v1587
    %v1589 = vmul.f32 %v1496, 1.442695
    %v1590 = vpow.pop %v1589
    %v1591 = vmul.f32 %v1497, 1.442695
    %v1592 = vpow.pop %v1591
    %v1593 = vmul.f32 %v1498, 1.442695
    %v1594 = vpow.pop %v1593
    %v1595 = vmul.f32 %v1499, 1.442695
    %v1596 = vpow.pop %v1595
    %v1597 = vmul.f32 %v1500, 1.442695
    %v1598 = vpow.pop %v1597
    %v1599 = vmul.f32 %v1501, 1.442695
    %v1600 = vpow.pop %v1599
    %v1601 = vmul.f32 %v1502, 1.442695
    %v1602 = vpow.pop %v1601
    %v1603 = vmul.f32 %v1503, 1.442695
    %v1604 = vpow.pop %v1603
    %v1605 = vmul.f32 %v1504, 1.442695
    %v1606 = vpow.pop %v1605
    %v1607 = vmul.f32 %v1505, 1.442695
    %v1608 = vpow.pop %v1607
    %v1609 = vmul.f32 %v1506, 1.442695
    %v1610 = vpow.pop %v1609
    %v1611 = vmul.f32 %v1507, 1.442695
    %v1612 = vpow.pop %v1611
    %v1613 = vmul.f32 %v1508, 1.442695
    %v1614 = vpow.pop %v1613
    %v1615 = vmul.f32 %v1509, 1.442695
    %v1616 = vpow.pop %v1615
    %v1617 = vmul.f32 %v1510, 1.442695
    %v1618 = vpow.pop %v1617
    %v1619 = vmul.f32 %v1511, 1.442695
    %v1620 = vpow.pop %v1619
    %v1621 = vmul.f32 %v1512, 1.442695
    %v1622 = vpow.pop %v1621
    %v1623 = vmul.f32 %v1513, 1.442695
    %v1624 = vpow.pop %v1623
    %v1625 = vmul.f32 %v1514, 1.442695
    %v1626 = vpow.pop %v1625
    %v1627 = vmul.f32 %v1515, 1.442695
    %v1628 = vpow.pop %v1627
    %v1629 = vmul.f32 %v1516, 1.442695
    %v1630 = vpow.pop %v1629
    %v1631 = vmul.f32 %v1517, 1.442695
    %v1632 = vpow.pop %v1631
    %v1633 = vmul.f32 %v1518, 1.442695
    %v1634 = vpow.pop %v1633
    %v1635 = vmul.f32 %v1519, 1.442695
    %v1636 = vpow.pop %v1635
    %v1637 = vmul.f32 %v1520, 1.442695
    %v1638 = vpow.pop %v1637
    %v1639 = vmul.f32 %v1521, 1.442695
    %v1640 = vpow.pop %v1639
    %v1641 = vmul.f32 %v1522, 1.442695
    %v1642 = vpow.pop %v1641
    %v1643 = vmul.f32 %v1523, 1.442695
    %v1644 = vpow.pop %v1643
    %v1645 = vmul.f32 %v1524, 1.442695
    %v1646 = vpow.pop %v1645
    %v1647 = vmul.f32 %v1525, 1.442695
    %v1648 = vpow.pop %v1647
    %v1649 = vmul.f32 %v1526, 1.442695
    %v1650 = vpow.pop %v1649
    %v1651 = vmul.f32 %v1527, 1.442695
    %v1652 = vpow.pop %v1651
    %v1653 = vmul.f32 %v1528, 1.442695
    %v1654 = vpow.pop %v1653
    %v1655 = vmul.f32 %v1529, 1.442695
    %v1656 = vpow.pop %v1655
    %v1657 = vmul.f32 %v1530, 1.442695
    %v1658 = vpow.pop %v1657
    %1659 = vadd.xlane.f32.xlu0 %v1532
    %v1660 = vpop.xlane.xlu0 %1659
    %1661 = vadd.xlane.f32.xlu0 %v1534
    %v1662 = vpop.xlane.xlu0 %1661
    %1663 = vadd.xlane.f32.xlu0 %v1536
    %v1664 = vpop.xlane.xlu0 %1663
    %1665 = vadd.xlane.f32.xlu0 %v1538
    %v1666 = vpop.xlane.xlu0 %1665
    %1667 = vadd.xlane.f32.xlu0 %v1540
    %v1668 = vpop.xlane.xlu0 %1667
    %1669 = vadd.xlane.f32.xlu0 %v1542
    %v1670 = vpop.xlane.xlu0 %1669
    %1671 = vadd.xlane.f32.xlu0 %v1544
    %v1672 = vpop.xlane.xlu0 %1671
    %1673 = vadd.xlane.f32.xlu0 %v1546
    %v1674 = vpop.xlane.xlu0 %1673
    %1675 = vadd.xlane.f32.xlu0 %v1548
    %v1676 = vpop.xlane.xlu0 %1675
    %1677 = vadd.xlane.f32.xlu0 %v1550
    %v1678 = vpop.xlane.xlu0 %1677
    %1679 = vadd.xlane.f32.xlu0 %v1552
    %v1680 = vpop.xlane.xlu0 %1679
    %1681 = vadd.xlane.f32.xlu0 %v1554
    %v1682 = vpop.xlane.xlu0 %1681
    %1683 = vadd.xlane.f32.xlu0 %v1556
    %v1684 = vpop.xlane.xlu0 %1683
    %1685 = vadd.xlane.f32.xlu0 %v1558
    %v1686 = vpop.xlane.xlu0 %1685
    %1687 = vadd.xlane.f32.xlu0 %v1560
    %v1688 = vpop.xlane.xlu0 %1687
    %1689 = vadd.xlane.f32.xlu0 %v1562
    %v1690 = vpop.xlane.xlu0 %1689
    %1691 = vadd.xlane.f32.xlu0 %v1564
    %v1692 = vpop.xlane.xlu0 %1691
    %1693 = vadd.xlane.f32.xlu0 %v1566
    %v1694 = vpop.xlane.xlu0 %1693
    %1695 = vadd.xlane.f32.xlu0 %v1568
    %v1696 = vpop.xlane.xlu0 %1695
    %1697 = vadd.xlane.f32.xlu0 %v1570
    %v1698 = vpop.xlane.xlu0 %1697
    %1699 = vadd.xlane.f32.xlu0 %v1572
    %v1700 = vpop.xlane.xlu0 %1699
    %1701 = vadd.xlane.f32.xlu0 %v1574
    %v1702 = vpop.xlane.xlu0 %1701
    %1703 = vadd.xlane.f32.xlu0 %v1576
    %v1704 = vpop.xlane.xlu0 %1703
    %1705 = vadd.xlane.f32.xlu0 %v1578
    %v1706 = vpop.xlane.xlu0 %1705
    %1707 = vadd.xlane.f32.xlu0 %v1580
    %v1708 = vpop.xlane.xlu0 %1707
    %1709 = vadd.xlane.f32.xlu0 %v1582
    %v1710 = vpop.xlane.xlu0 %1709
    %1711 = vadd.xlane.f32.xlu0 %v1584
    %v1712 = vpop.xlane.xlu0 %1711
    %1713 = vadd.xlane.f32.xlu0 %v1586
    %v1714 = vpop.xlane.xlu0 %1713
    %1715 = vadd.xlane.f32.xlu0 %v1588
    %v1716 = vpop.xlane.xlu0 %1715
    %1717 = vadd.xlane.f32.xlu0 %v1590
    %v1718 = vpop.xlane.xlu0 %1717
    %1719 = vadd.xlane.f32.xlu0 %v1592
    %v1720 = vpop.xlane.xlu0 %1719
    %1721 = vadd.xlane.f32.xlu0 %v1594
    %v1722 = vpop.xlane.xlu0 %1721
    %1723 = vadd.xlane.f32.xlu0 %v1596
    %v1724 = vpop.xlane.xlu0 %1723
    %1725 = vadd.xlane.f32.xlu0 %v1598
    %v1726 = vpop.xlane.xlu0 %1725
    %1727 = vadd.xlane.f32.xlu0 %v1600
    %v1728 = vpop.xlane.xlu0 %1727
    %1729 = vadd.xlane.f32.xlu0 %v1602
    %v1730 = vpop.xlane.xlu0 %1729
    %1731 = vadd.xlane.f32.xlu0 %v1604
    %v1732 = vpop.xlane.xlu0 %1731
    %1733 = vadd.xlane.f32.xlu0 %v1606
    %v1734 = vpop.xlane.xlu0 %1733
    %1735 = vadd.xlane.f32.xlu0 %v1608
    %v1736 = vpop.xlane.xlu0 %1735
    %1737 = vadd.xlane.f32.xlu0 %v1610
    %v1738 = vpop.xlane.xlu0 %1737
    %1739 = vadd.xlane.f32.xlu0 %v1612
    %v1740 = vpop.xlane.xlu0 %1739
    %1741 = vadd.xlane.f32.xlu0 %v1614
    %v1742 = vpop.xlane.xlu0 %1741
    %1743 = vadd.xlane.f32.xlu0 %v1616
    %v1744 = vpop.xlane.xlu0 %1743
    %1745 = vadd.xlane.f32.xlu0 %v1618
    %v1746 = vpop.xlane.xlu0 %1745
    %1747 = vadd.xlane.f32.xlu0 %v1620
    %v1748 = vpop.xlane.xlu0 %1747
    %1749 = vadd.xlane.f32.xlu0 %v1622
    %v1750 = vpop.xlane.xlu0 %1749
    %1751 = vadd.xlane.f32.xlu0 %v1624
    %v1752 = vpop.xlane.xlu0 %1751
    %1753 = vadd.xlane.f32.xlu0 %v1626
    %v1754 = vpop.xlane.xlu0 %1753
    %1755 = vadd.xlane.f32.xlu0 %v1628
    %v1756 = vpop.xlane.xlu0 %1755
    %1757 = vadd.xlane.f32.xlu0 %v1630
    %v1758 = vpop.xlane.xlu0 %1757
    %1759 = vadd.xlane.f32.xlu0 %v1632
    %v1760 = vpop.xlane.xlu0 %1759
    %1761 = vadd.xlane.f32.xlu0 %v1634
    %v1762 = vpop.xlane.xlu0 %1761
    %1763 = vadd.xlane.f32.xlu0 %v1636
    %v1764 = vpop.xlane.xlu0 %1763
    %1765 = vadd.xlane.f32.xlu0 %v1638
    %v1766 = vpop.xlane.xlu0 %1765
    %1767 = vadd.xlane.f32.xlu0 %v1640
    %v1768 = vpop.xlane.xlu0 %1767
    %1769 = vadd.xlane.f32.xlu0 %v1642
    %v1770 = vpop.xlane.xlu0 %1769
    %1771 = vadd.xlane.f32.xlu0 %v1644
    %v1772 = vpop.xlane.xlu0 %1771
    %1773 = vadd.xlane.f32.xlu0 %v1646
    %v1774 = vpop.xlane.xlu0 %1773
    %1775 = vadd.xlane.f32.xlu0 %v1648
    %v1776 = vpop.xlane.xlu0 %1775
    %1777 = vadd.xlane.f32.xlu0 %v1650
    %v1778 = vpop.xlane.xlu0 %1777
    %1779 = vadd.xlane.f32.xlu0 %v1652
    %v1780 = vpop.xlane.xlu0 %1779
    %1781 = vadd.xlane.f32.xlu0 %v1654
    %v1782 = vpop.xlane.xlu0 %1781
    %1783 = vadd.xlane.f32.xlu0 %v1656
    %v1784 = vpop.xlane.xlu0 %1783
    %1785 = vadd.xlane.f32.xlu0 %v1658
    %v1786 = vpop.xlane.xlu0 %1785
    %v1787 = vrcp.pop %v1660
    %v1788 = vrcp.pop %v1662
    %v1789 = vrcp.pop %v1664
    %v1790 = vrcp.pop %v1666
    %v1791 = vrcp.pop %v1668
    %v1792 = vrcp.pop %v1670
    %v1793 = vrcp.pop %v1672
    %v1794 = vrcp.pop %v1674
    %v1795 = vrcp.pop %v1676
    %v1796 = vrcp.pop %v1678
    %v1797 = vrcp.pop %v1680
    %v1798 = vrcp.pop %v1682
    %v1799 = vrcp.pop %v1684
    %v1800 = vrcp.pop %v1686
    %v1801 = vrcp.pop %v1688
    %v1802 = vrcp.pop %v1690
    %v1803 = vrcp.pop %v1692
    %v1804 = vrcp.pop %v1694
    %v1805 = vrcp.pop %v1696
    %v1806 = vrcp.pop %v1698
    %v1807 = vrcp.pop %v1700
    %v1808 = vrcp.pop %v1702
    %v1809 = vrcp.pop %v1704
    %v1810 = vrcp.pop %v1706
    %v1811 = vrcp.pop %v1708
    %v1812 = vrcp.pop %v1710
    %v1813 = vrcp.pop %v1712
    %v1814 = vrcp.pop %v1714
    %v1815 = vrcp.pop %v1716
    %v1816 = vrcp.pop %v1718
    %v1817 = vrcp.pop %v1720
    %v1818 = vrcp.pop %v1722
    %v1819 = vrcp.pop %v1724
    %v1820 = vrcp.pop %v1726
    %v1821 = vrcp.pop %v1728
    %v1822 = vrcp.pop %v1730
    %v1823 = vrcp.pop %v1732
    %v1824 = vrcp.pop %v1734
    %v1825 = vrcp.pop %v1736
    %v1826 = vrcp.pop %v1738
    %v1827 = vrcp.pop %v1740
    %v1828 = vrcp.pop %v1742
    %v1829 = vrcp.pop %v1744
    %v1830 = vrcp.pop %v1746
    %v1831 = vrcp.pop %v1748
    %v1832 = vrcp.pop %v1750
    %v1833 = vrcp.pop %v1752
    %v1834 = vrcp.pop %v1754
    %v1835 = vrcp.pop %v1756
    %v1836 = vrcp.pop %v1758
    %v1837 = vrcp.pop %v1760
    %v1838 = vrcp.pop %v1762
    %v1839 = vrcp.pop %v1764
    %v1840 = vrcp.pop %v1766
    %v1841 = vrcp.pop %v1768
    %v1842 = vrcp.pop %v1770
    %v1843 = vrcp.pop %v1772
    %v1844 = vrcp.pop %v1774
    %v1845 = vrcp.pop %v1776
    %v1846 = vrcp.pop %v1778
    %v1847 = vrcp.pop %v1780
    %v1848 = vrcp.pop %v1782
    %v1849 = vrcp.pop %v1784
    %v1850 = vrcp.pop %v1786
    %v1851 = vmul.f32 %v1532, %v1787
    %v1852 = vmul.f32 %v1534, %v1788
    %v1853 = vmul.f32 %v1536, %v1789
    %v1854 = vmul.f32 %v1538, %v1790
    %v1855 = vmul.f32 %v1540, %v1791
    %v1856 = vmul.f32 %v1542, %v1792
    %v1857 = vmul.f32 %v1544, %v1793
    %v1858 = vmul.f32 %v1546, %v1794
    %v1859 = vmul.f32 %v1548, %v1795
    %v1860 = vmul.f32 %v1550, %v1796
    %v1861 = vmul.f32 %v1552, %v1797
    %v1862 = vmul.f32 %v1554, %v1798
    %v1863 = vmul.f32 %v1556, %v1799
    %v1864 = vmul.f32 %v1558, %v1800
    %v1865 = vmul.f32 %v1560, %v1801
    %v1866 = vmul.f32 %v1562, %v1802
    %v1867 = vmul.f32 %v1564, %v1803
    %v1868 = vmul.f32 %v1566, %v1804
    %v1869 = vmul.f32 %v1568, %v1805
    %v1870 = vmul.f32 %v1570, %v1806
    %v1871 = vmul.f32 %v1572, %v1807
    %v1872 = vmul.f32 %v1574, %v1808
    %v1873 = vmul.f32 %v1576, %v1809
    %v1874 = vmul.f32 %v1578, %v1810
    %v1875 = vmul.f32 %v1580, %v1811
    %v1876 = vmul.f32 %v1582, %v1812
    %v1877 = vmul.f32 %v1584, %v1813
    %v1878 = vmul.f32 %v1586, %v1814
    %v1879 = vmul.f32 %v1588, %v1815
    %v1880 = vmul.f32 %v1590, %v1816
    %v1881 = vmul.f32 %v1592, %v1817
    %v1882 = vmul.f32 %v1594, %v1818
    %v1883 = vmul.f32 %v1596, %v1819
    %v1884 = vmul.f32 %v1598, %v1820
    %v1885 = vmul.f32 %v1600, %v1821
    %v1886 = vmul.f32 %v1602, %v1822
    %v1887 = vmul.f32 %v1604, %v1823
    %v1888 = vmul.f32 %v1606, %v1824
    %v1889 = vmul.f32 %v1608, %v1825
    %v1890 = vmul.f32 %v1610, %v1826
    %v1891 = vmul.f32 %v1612, %v1827
    %v1892 = vmul.f32 %v1614, %v1828
    %v1893 = vmul.f32 %v1616, %v1829
    %v1894 = vmul.f32 %v1618, %v1830
    %v1895 = vmul.f32 %v1620, %v1831
    %v1896 = vmul.f32 %v1622, %v1832
    %v1897 = vmul.f32 %v1624, %v1833
    %v1898 = vmul.f32 %v1626, %v1834
    %v1899 = vmul.f32 %v1628, %v1835
    %v1900 = vmul.f32 %v1630, %v1836
    %v1901 = vmul.f32 %v1632, %v1837
    %v1902 = vmul.f32 %v1634, %v1838
    %v1903 = vmul.f32 %v1636, %v1839
    %v1904 = vmul.f32 %v1638, %v1840
    %v1905 = vmul.f32 %v1640, %v1841
    %v1906 = vmul.f32 %v1642, %v1842
    %v1907 = vmul.f32 %v1644, %v1843
    %v1908 = vmul.f32 %v1646, %v1844
    %v1909 = vmul.f32 %v1648, %v1845
    %v1910 = vmul.f32 %v1650, %v1846
    %v1911 = vmul.f32 %v1652, %v1847
    %v1912 = vmul.f32 %v1654, %v1848
    %v1913 = vmul.f32 %v1656, %v1849
    %v1914 = vmul.f32 %v1658, %v1850
    %1915 = vrot.lane.b32.xlu0 %v168, 64
    %v1916 = vpop.permute.xlu0 %1915
    %1917 = vrot.lane.b32.xlu0 %v173, 64
    %v1918 = vpop.permute.xlu0 %1917
    %1919 = vrot.lane.b32.xlu0 %v178, 64
    %v1920 = vpop.permute.xlu0 %1919
    %1921 = vrot.lane.b32.xlu0 %v183, 64
    %v1922 = vpop.permute.xlu0 %1921
    %1923 = vrot.lane.b32.xlu0 %v188, 64
    %v1924 = vpop.permute.xlu0 %1923
    %1925 = vrot.lane.b32.xlu0 %v193, 64
    %v1926 = vpop.permute.xlu0 %1925
    %1927 = vrot.lane.b32.xlu0 %v198, 64
    %v1928 = vpop.permute.xlu0 %1927
    %1929 = vrot.lane.b32.xlu0 %v203, 64
    %v1930 = vpop.permute.xlu0 %1929
    %1931 = vrot.lane.b32.xlu0 %v208, 64
    %v1932 = vpop.permute.xlu0 %1931
    %1933 = vrot.lane.b32.xlu0 %v213, 64
    %v1934 = vpop.permute.xlu0 %1933
    %1935 = vrot.lane.b32.xlu0 %v218, 64
    %v1936 = vpop.permute.xlu0 %1935
    %1937 = vrot.lane.b32.xlu0 %v223, 64
    %v1938 = vpop.permute.xlu0 %1937
    %1939 = vrot.lane.b32.xlu0 %v228, 64
    %v1940 = vpop.permute.xlu0 %1939
    %1941 = vrot.lane.b32.xlu0 %v233, 64
    %v1942 = vpop.permute.xlu0 %1941
    %1943 = vrot.lane.b32.xlu0 %v238, 64
    %v1944 = vpop.permute.xlu0 %1943
    %1945 = vrot.lane.b32.xlu0 %v243, 64
    %v1946 = vpop.permute.xlu0 %1945
    %1963 = vmatprep.subr.mxu0 0.0
    %1964 = vmatpush1.msra.mxu0 %v1946
    %1965 = vmatprep.subr.mxu0 0.0
    %1966 = vmatpush1.msra.mxu0 %v1944
    %1967 = vmatprep.subr.mxu0 0.0
    %1968 = vmatpush1.msra.mxu0 %v1942
    %1969 = vmatprep.subr.mxu0 0.0
    %1970 = vmatpush1.msra.mxu0 %v1940
    %1971 = vmatprep.subr.mxu0 0.0
    %1972 = vmatpush1.msra.mxu0 %v1938
    %1973 = vmatprep.subr.mxu0 0.0
    %1974 = vmatpush1.msra.mxu0 %v1936
    %1975 = vmatprep.subr.mxu0 0.0
    %1976 = vmatpush1.msra.mxu0 %v1934
    %1977 = vmatprep.subr.mxu0 0.0
    %1978 = vmatpush1.msra.mxu0 %v1932
    %1979 = vmatprep.subr.mxu0 0.0
    %1980 = vmatpush1.msra.mxu0 %v1930
    %1981 = vmatprep.subr.mxu0 0.0
    %1982 = vmatpush1.msra.mxu0 %v1928
    %1983 = vmatprep.subr.mxu0 0.0
    %1984 = vmatpush1.msra.mxu0 %v1926
    %1985 = vmatprep.subr.mxu0 0.0
    %1986 = vmatpush1.msra.mxu0 %v1924
    %1987 = vmatprep.subr.mxu0 0.0
    %1988 = vmatpush1.msra.mxu0 %v1922
    %1989 = vmatprep.subr.mxu0 0.0
    %1990 = vmatpush1.msra.mxu0 %v1920
    %1991 = vmatprep.subr.mxu0 0.0
    %1992 = vmatpush1.msra.mxu0 %v1918
    %1993 = vmatprep.subr.mxu0 0.0
    %1994 = vmatpush1.msra.mxu0 %v1916
    %1995 = vmatprep.subr.mxu0 0.0
    %1996 = vmatpush2.msra.mxu0 0.0
    %1997 = vmatprep.subr.mxu0 0.0
    %1998 = vmatpush2.msra.mxu0 0.0
    %1999 = vmatprep.subr.mxu0 0.0
    %2000 = vmatpush2.msra.mxu0 0.0
    %2001 = vmatprep.subr.mxu0 0.0
    %2002 = vmatpush2.msra.mxu0 0.0
    %2003 = vmatprep.subr.mxu0 0.0
    %2004 = vmatpush2.msra.mxu0 0.0
    %2005 = vmatprep.subr.mxu0 0.0
    %2006 = vmatpush2.msra.mxu0 0.0
    %2007 = vmatprep.subr.mxu0 0.0
    %2008 = vmatpush2.msra.mxu0 0.0
    %2009 = vmatprep.subr.mxu0 0.0
    %2010 = vmatpush2.msra.mxu0 0.0
    %2011 = vmatprep.subr.mxu0 0.0
    %2012 = vmatpush2.msra.mxu0 0.0
    %2013 = vmatprep.subr.mxu0 0.0
    %2014 = vmatpush2.msra.mxu0 0.0
    %2015 = vmatprep.subr.mxu0 0.0
    %2016 = vmatpush2.msra.mxu0 0.0
    %2017 = vmatprep.subr.mxu0 0.0
    %2018 = vmatpush2.msra.mxu0 0.0
    %2019 = vmatprep.subr.mxu0 0.0
    %2020 = vmatpush2.msra.mxu0 0.0
    %2021 = vmatprep.subr.mxu0 0.0
    %2022 = vmatpush2.msra.mxu0 0.0
    %2023 = vmatprep.subr.mxu0 0.0
    %2024 = vmatpush2.msra.mxu0 0.0
    %2025 = vmatprep.subr.mxu0 0.0
    %2026 = vmatpush2.msra.mxu0 0.0
    %2027 = vmatprep.mubr.f32.mxu0 0.0
    %2028 = vmatmul.mubr.f32.gmra.mxu0 %v1851
    %v2029 = vpop.f32.mrf.mxu0
    %v2030 = vadd.f32 0.0, %v2029
    %v2031 = vpop.f32.mrf.mxu0
    %2032 = vmatprep.mubr.f32.mxu0 0.0
    %2033 = vmatmul.mubr.f32.gmra.mxu0 %v1852
    %v2034 = vpop.f32.mrf.mxu0
    %v2035 = vadd.f32 0.0, %v2034
    %v2036 = vpop.f32.mrf.mxu0
    %2037 = vmatprep.mubr.f32.mxu0 0.0
    %2038 = vmatmul.mubr.f32.gmra.mxu0 %v1853
    %v2039 = vpop.f32.mrf.mxu0
    %v2040 = vadd.f32 0.0, %v2039
    %v2041 = vpop.f32.mrf.mxu0
    %2042 = vmatprep.mubr.f32.mxu0 0.0
    %2043 = vmatmul.mubr.f32.gmra.mxu0 %v1854
    %v2044 = vpop.f32.mrf.mxu0
    %v2045 = vadd.f32 0.0, %v2044
    %v2046 = vpop.f32.mrf.mxu0
    %2047 = vmatprep.mubr.f32.mxu0 0.0
    %2048 = vmatmul.mubr.f32.gmra.mxu0 %v1855
    %v2049 = vpop.f32.mrf.mxu0
    %v2050 = vadd.f32 0.0, %v2049
    %v2051 = vpop.f32.mrf.mxu0
    %2052 = vmatprep.mubr.f32.mxu0 0.0
    %2053 = vmatmul.mubr.f32.gmra.mxu0 %v1856
    %v2054 = vpop.f32.mrf.mxu0
    %v2055 = vadd.f32 0.0, %v2054
    %v2056 = vpop.f32.mrf.mxu0
    %2057 = vmatprep.mubr.f32.mxu0 0.0
    %2058 = vmatmul.mubr.f32.gmra.mxu0 %v1857
    %v2059 = vpop.f32.mrf.mxu0
    %v2060 = vadd.f32 0.0, %v2059
    %v2061 = vpop.f32.mrf.mxu0
    %2062 = vmatprep.mubr.f32.mxu0 0.0
    %2063 = vmatmul.mubr.f32.gmra.mxu0 %v1858
    %v2064 = vpop.f32.mrf.mxu0
    %v2065 = vadd.f32 0.0, %v2064
    %v2066 = vpop.f32.mrf.mxu0
    %2067 = vmatprep.mubr.f32.mxu0 0.0
    %2068 = vmatmul.mubr.f32.gmra.mxu0 %v1859
    %v2069 = vpop.f32.mrf.mxu0
    %v2070 = vadd.f32 0.0, %v2069
    %v2071 = vpop.f32.mrf.mxu0
    %2072 = vmatprep.mubr.f32.mxu0 0.0
    %2073 = vmatmul.mubr.f32.gmra.mxu0 %v1860
    %v2074 = vpop.f32.mrf.mxu0
    %v2075 = vadd.f32 0.0, %v2074
    %v2076 = vpop.f32.mrf.mxu0
    %2077 = vmatprep.mubr.f32.mxu0 0.0
    %2078 = vmatmul.mubr.f32.gmra.mxu0 %v1861
    %v2079 = vpop.f32.mrf.mxu0
    %v2080 = vadd.f32 0.0, %v2079
    %v2081 = vpop.f32.mrf.mxu0
    %2082 = vmatprep.mubr.f32.mxu0 0.0
    %2083 = vmatmul.mubr.f32.gmra.mxu0 %v1862
    %v2084 = vpop.f32.mrf.mxu0
    %v2085 = vadd.f32 0.0, %v2084
    %v2086 = vpop.f32.mrf.mxu0
    %2087 = vmatprep.mubr.f32.mxu0 0.0
    %2088 = vmatmul.mubr.f32.gmra.mxu0 %v1863
    %v2089 = vpop.f32.mrf.mxu0
    %v2090 = vadd.f32 0.0, %v2089
    %v2091 = vpop.f32.mrf.mxu0
    %2092 = vmatprep.mubr.f32.mxu0 0.0
    %2093 = vmatmul.mubr.f32.gmra.mxu0 %v1864
    %v2094 = vpop.f32.mrf.mxu0
    %v2095 = vadd.f32 0.0, %v2094
    %v2096 = vpop.f32.mrf.mxu0
    %2097 = vmatprep.mubr.f32.mxu0 0.0
    %2098 = vmatmul.mubr.f32.gmra.mxu0 %v1865
    %v2099 = vpop.f32.mrf.mxu0
    %v2100 = vadd.f32 0.0, %v2099
    %v2101 = vpop.f32.mrf.mxu0
    %2102 = vmatprep.mubr.f32.mxu0 0.0
    %2103 = vmatmul.mubr.f32.gmra.mxu0 %v1866
    %v2104 = vpop.f32.mrf.mxu0
    %v2105 = vadd.f32 0.0, %v2104
    %v2106 = vpop.f32.mrf.mxu0
    %2107 = vdwg.mxu0
    %2108 = vrot.lane.b32.xlu0 %v263, 64
    %v2109 = vpop.permute.xlu0 %2108
    %2110 = vrot.lane.b32.xlu0 %v265, 64
    %v2111 = vpop.permute.xlu0 %2110
    %2112 = vrot.lane.b32.xlu0 %v267, 64
    %v2113 = vpop.permute.xlu0 %2112
    %2114 = vrot.lane.b32.xlu0 %v269, 64
    %v2115 = vpop.permute.xlu0 %2114
    %2116 = vrot.lane.b32.xlu0 %v271, 64
    %v2117 = vpop.permute.xlu0 %2116
    %2118 = vrot.lane.b32.xlu0 %v273, 64
    %v2119 = vpop.permute.xlu0 %2118
    %2120 = vrot.lane.b32.xlu0 %v275, 64
    %v2121 = vpop.permute.xlu0 %2120
    %2122 = vrot.lane.b32.xlu0 %v277, 64
    %v2123 = vpop.permute.xlu0 %2122
    %2124 = vrot.lane.b32.xlu0 %v279, 64
    %v2125 = vpop.permute.xlu0 %2124
    %2126 = vrot.lane.b32.xlu0 %v281, 64
    %v2127 = vpop.permute.xlu0 %2126
    %2128 = vrot.lane.b32.xlu0 %v283, 64
    %v2129 = vpop.permute.xlu0 %2128
    %2130 = vrot.lane.b32.xlu0 %v285, 64
    %v2131 = vpop.permute.xlu0 %2130
    %2132 = vrot.lane.b32.xlu0 %v287, 64
    %v2133 = vpop.permute.xlu0 %2132
    %2134 = vrot.lane.b32.xlu0 %v289, 64
    %v2135 = vpop.permute.xlu0 %2134
    %2136 = vrot.lane.b32.xlu0 %v291, 64
    %v2137 = vpop.permute.xlu0 %2136
    %2138 = vrot.lane.b32.xlu0 %v293, 64
    %v2139 = vpop.permute.xlu0 %2138
    %2156 = vmatprep.subr.mxu0 0.0
    %2157 = vmatpush1.msra.mxu0 %v2139
    %2158 = vmatprep.subr.mxu0 0.0
    %2159 = vmatpush1.msra.mxu0 %v2137
    %2160 = vmatprep.subr.mxu0 0.0
    %2161 = vmatpush1.msra.mxu0 %v2135
    %2162 = vmatprep.subr.mxu0 0.0
    %2163 = vmatpush1.msra.mxu0 %v2133
    %2164 = vmatprep.subr.mxu0 0.0
    %2165 = vmatpush1.msra.mxu0 %v2131
    %2166 = vmatprep.subr.mxu0 0.0
    %2167 = vmatpush1.msra.mxu0 %v2129
    %2168 = vmatprep.subr.mxu0 0.0
    %2169 = vmatpush1.msra.mxu0 %v2127
    %2170 = vmatprep.subr.mxu0 0.0
    %2171 = vmatpush1.msra.mxu0 %v2125
    %2172 = vmatprep.subr.mxu0 0.0
    %2173 = vmatpush1.msra.mxu0 %v2123
    %2174 = vmatprep.subr.mxu0 0.0
    %2175 = vmatpush1.msra.mxu0 %v2121
    %2176 = vmatprep.subr.mxu0 0.0
    %2177 = vmatpush1.msra.mxu0 %v2119
    %2178 = vmatprep.subr.mxu0 0.0
    %2179 = vmatpush1.msra.mxu0 %v2117
    %2180 = vmatprep.subr.mxu0 0.0
    %2181 = vmatpush1.msra.mxu0 %v2115
    %2182 = vmatprep.subr.mxu0 0.0
    %2183 = vmatpush1.msra.mxu0 %v2113
    %2184 = vmatprep.subr.mxu0 0.0
    %2185 = vmatpush1.msra.mxu0 %v2111
    %2186 = vmatprep.subr.mxu0 0.0
    %2187 = vmatpush1.msra.mxu0 %v2109
    %2188 = vmatprep.subr.mxu0 0.0
    %2189 = vmatpush2.msra.mxu0 0.0
    %2190 = vmatprep.subr.mxu0 0.0
    %2191 = vmatpush2.msra.mxu0 0.0
    %2192 = vmatprep.subr.mxu0 0.0
    %2193 = vmatpush2.msra.mxu0 0.0
    %2194 = vmatprep.subr.mxu0 0.0
    %2195 = vmatpush2.msra.mxu0 0.0
    %2196 = vmatprep.subr.mxu0 0.0
    %2197 = vmatpush2.msra.mxu0 0.0
    %2198 = vmatprep.subr.mxu0 0.0
    %2199 = vmatpush2.msra.mxu0 0.0
    %2200 = vmatprep.subr.mxu0 0.0
    %2201 = vmatpush2.msra.mxu0 0.0
    %2202 = vmatprep.subr.mxu0 0.0
    %2203 = vmatpush2.msra.mxu0 0.0
    %2204 = vmatprep.subr.mxu0 0.0
    %2205 = vmatpush2.msra.mxu0 0.0
    %2206 = vmatprep.subr.mxu0 0.0
    %2207 = vmatpush2.msra.mxu0 0.0
    %2208 = vmatprep.subr.mxu0 0.0
    %2209 = vmatpush2.msra.mxu0 0.0
    %2210 = vmatprep.subr.mxu0 0.0
    %2211 = vmatpush2.msra.mxu0 0.0
    %2212 = vmatprep.subr.mxu0 0.0
    %2213 = vmatpush2.msra.mxu0 0.0
    %2214 = vmatprep.subr.mxu0 0.0
    %2215 = vmatpush2.msra.mxu0 0.0
    %2216 = vmatprep.subr.mxu0 0.0
    %2217 = vmatpush2.msra.mxu0 0.0
    %2218 = vmatprep.subr.mxu0 0.0
    %2219 = vmatpush2.msra.mxu0 0.0
    %2220 = vmatprep.mubr.f32.mxu0 0.0
    %2221 = vmatmul.mubr.f32.gmra.mxu0 %v1867
    %v2222 = vpop.f32.mrf.mxu0
    %v2223 = vadd.f32 0.0, %v2222
    %v2224 = vpop.f32.mrf.mxu0
    %2225 = vmatprep.mubr.f32.mxu0 0.0
    %2226 = vmatmul.mubr.f32.gmra.mxu0 %v1868
    %v2227 = vpop.f32.mrf.mxu0
    %v2228 = vadd.f32 0.0, %v2227
    %v2229 = vpop.f32.mrf.mxu0
    %2230 = vmatprep.mubr.f32.mxu0 0.0
    %2231 = vmatmul.mubr.f32.gmra.mxu0 %v1869
    %v2232 = vpop.f32.mrf.mxu0
    %v2233 = vadd.f32 0.0, %v2232
    %v2234 = vpop.f32.mrf.mxu0
    %2235 = vmatprep.mubr.f32.mxu0 0.0
    %2236 = vmatmul.mubr.f32.gmra.mxu0 %v1870
    %v2237 = vpop.f32.mrf.mxu0
    %v2238 = vadd.f32 0.0, %v2237
    %v2239 = vpop.f32.mrf.mxu0
    %2240 = vmatprep.mubr.f32.mxu0 0.0
    %2241 = vmatmul.mubr.f32.gmra.mxu0 %v1871
    %v2242 = vpop.f32.mrf.mxu0
    %v2243 = vadd.f32 0.0, %v2242
    %v2244 = vpop.f32.mrf.mxu0
    %2245 = vmatprep.mubr.f32.mxu0 0.0
    %2246 = vmatmul.mubr.f32.gmra.mxu0 %v1872
    %v2247 = vpop.f32.mrf.mxu0
    %v2248 = vadd.f32 0.0, %v2247
    %v2249 = vpop.f32.mrf.mxu0
    %2250 = vmatprep.mubr.f32.mxu0 0.0
    %2251 = vmatmul.mubr.f32.gmra.mxu0 %v1873
    %v2252 = vpop.f32.mrf.mxu0
    %v2253 = vadd.f32 0.0, %v2252
    %v2254 = vpop.f32.mrf.mxu0
    %2255 = vmatprep.mubr.f32.mxu0 0.0
    %2256 = vmatmul.mubr.f32.gmra.mxu0 %v1874
    %v2257 = vpop.f32.mrf.mxu0
    %v2258 = vadd.f32 0.0, %v2257
    %v2259 = vpop.f32.mrf.mxu0
    %2260 = vmatprep.mubr.f32.mxu0 0.0
    %2261 = vmatmul.mubr.f32.gmra.mxu0 %v1875
    %v2262 = vpop.f32.mrf.mxu0
    %v2263 = vadd.f32 0.0, %v2262
    %v2264 = vpop.f32.mrf.mxu0
    %2265 = vmatprep.mubr.f32.mxu0 0.0
    %2266 = vmatmul.mubr.f32.gmra.mxu0 %v1876
    %v2267 = vpop.f32.mrf.mxu0
    %v2268 = vadd.f32 0.0, %v2267
    %v2269 = vpop.f32.mrf.mxu0
    %2270 = vmatprep.mubr.f32.mxu0 0.0
    %2271 = vmatmul.mubr.f32.gmra.mxu0 %v1877
    %v2272 = vpop.f32.mrf.mxu0
    %v2273 = vadd.f32 0.0, %v2272
    %v2274 = vpop.f32.mrf.mxu0
    %2275 = vmatprep.mubr.f32.mxu0 0.0
    %2276 = vmatmul.mubr.f32.gmra.mxu0 %v1878
    %v2277 = vpop.f32.mrf.mxu0
    %v2278 = vadd.f32 0.0, %v2277
    %v2279 = vpop.f32.mrf.mxu0
    %2280 = vmatprep.mubr.f32.mxu0 0.0
    %2281 = vmatmul.mubr.f32.gmra.mxu0 %v1879
    %v2282 = vpop.f32.mrf.mxu0
    %v2283 = vadd.f32 0.0, %v2282
    %v2284 = vpop.f32.mrf.mxu0
    %2285 = vmatprep.mubr.f32.mxu0 0.0
    %2286 = vmatmul.mubr.f32.gmra.mxu0 %v1880
    %v2287 = vpop.f32.mrf.mxu0
    %v2288 = vadd.f32 0.0, %v2287
    %v2289 = vpop.f32.mrf.mxu0
    %2290 = vmatprep.mubr.f32.mxu0 0.0
    %2291 = vmatmul.mubr.f32.gmra.mxu0 %v1881
    %v2292 = vpop.f32.mrf.mxu0
    %v2293 = vadd.f32 0.0, %v2292
    %v2294 = vpop.f32.mrf.mxu0
    %2295 = vmatprep.mubr.f32.mxu0 0.0
    %2296 = vmatmul.mubr.f32.gmra.mxu0 %v1882
    %v2297 = vpop.f32.mrf.mxu0
    %v2298 = vadd.f32 0.0, %v2297
    %v2299 = vpop.f32.mrf.mxu0
    %2300 = vdwg.mxu0
    %2301 = vrot.lane.b32.xlu0 %v295, 64
    %v2302 = vpop.permute.xlu0 %2301
    %2303 = vrot.lane.b32.xlu0 %v297, 64
    %v2304 = vpop.permute.xlu0 %2303
    %2305 = vrot.lane.b32.xlu0 %v299, 64
    %v2306 = vpop.permute.xlu0 %2305
    %2307 = vrot.lane.b32.xlu0 %v301, 64
    %v2308 = vpop.permute.xlu0 %2307
    %2309 = vrot.lane.b32.xlu0 %v303, 64
    %v2310 = vpop.permute.xlu0 %2309
    %2311 = vrot.lane.b32.xlu0 %v305, 64
    %v2312 = vpop.permute.xlu0 %2311
    %2313 = vrot.lane.b32.xlu0 %v307, 64
    %v2314 = vpop.permute.xlu0 %2313
    %2315 = vrot.lane.b32.xlu0 %v309, 64
    %v2316 = vpop.permute.xlu0 %2315
    %2317 = vrot.lane.b32.xlu0 %v311, 64
    %v2318 = vpop.permute.xlu0 %2317
    %2319 = vrot.lane.b32.xlu0 %v313, 64
    %v2320 = vpop.permute.xlu0 %2319
    %2321 = vrot.lane.b32.xlu0 %v315, 64
    %v2322 = vpop.permute.xlu0 %2321
    %2323 = vrot.lane.b32.xlu0 %v317, 64
    %v2324 = vpop.permute.xlu0 %2323
    %2325 = vrot.lane.b32.xlu0 %v319, 64
    %v2326 = vpop.permute.xlu0 %2325
    %2327 = vrot.lane.b32.xlu0 %v321, 64
    %v2328 = vpop.permute.xlu0 %2327
    %2329 = vrot.lane.b32.xlu0 %v323, 64
    %v2330 = vpop.permute.xlu0 %2329
    %2331 = vrot.lane.b32.xlu0 %v325, 64
    %v2332 = vpop.permute.xlu0 %2331
    %2349 = vmatprep.subr.mxu0 0.0
    %2350 = vmatpush1.msra.mxu0 %v2332
    %2351 = vmatprep.subr.mxu0 0.0
    %2352 = vmatpush1.msra.mxu0 %v2330
    %2353 = vmatprep.subr.mxu0 0.0
    %2354 = vmatpush1.msra.mxu0 %v2328
    %2355 = vmatprep.subr.mxu0 0.0
    %2356 = vmatpush1.msra.mxu0 %v2326
    %2357 = vmatprep.subr.mxu0 0.0
    %2358 = vmatpush1.msra.mxu0 %v2324
    %2359 = vmatprep.subr.mxu0 0.0
    %2360 = vmatpush1.msra.mxu0 %v2322
    %2361 = vmatprep.subr.mxu0 0.0
    %2362 = vmatpush1.msra.mxu0 %v2320
    %2363 = vmatprep.subr.mxu0 0.0
    %2364 = vmatpush1.msra.mxu0 %v2318
    %2365 = vmatprep.subr.mxu0 0.0
    %2366 = vmatpush1.msra.mxu0 %v2316
    %2367 = vmatprep.subr.mxu0 0.0
    %2368 = vmatpush1.msra.mxu0 %v2314
    %2369 = vmatprep.subr.mxu0 0.0
    %2370 = vmatpush1.msra.mxu0 %v2312
    %2371 = vmatprep.subr.mxu0 0.0
    %2372 = vmatpush1.msra.mxu0 %v2310
    %2373 = vmatprep.subr.mxu0 0.0
    %2374 = vmatpush1.msra.mxu0 %v2308
    %2375 = vmatprep.subr.mxu0 0.0
    %2376 = vmatpush1.msra.mxu0 %v2306
    %2377 = vmatprep.subr.mxu0 0.0
    %2378 = vmatpush1.msra.mxu0 %v2304
    %2379 = vmatprep.subr.mxu0 0.0
    %2380 = vmatpush1.msra.mxu0 %v2302
    %2381 = vmatprep.subr.mxu0 0.0
    %2382 = vmatpush2.msra.mxu0 0.0
    %2383 = vmatprep.subr.mxu0 0.0
    %2384 = vmatpush2.msra.mxu0 0.0
    %2385 = vmatprep.subr.mxu0 0.0
    %2386 = vmatpush2.msra.mxu0 0.0
    %2387 = vmatprep.subr.mxu0 0.0
    %2388 = vmatpush2.msra.mxu0 0.0
    %2389 = vmatprep.subr.mxu0 0.0
    %2390 = vmatpush2.msra.mxu0 0.0
    %2391 = vmatprep.subr.mxu0 0.0
    %2392 = vmatpush2.msra.mxu0 0.0
    %2393 = vmatprep.subr.mxu0 0.0
    %2394 = vmatpush2.msra.mxu0 0.0
    %2395 = vmatprep.subr.mxu0 0.0
    %2396 = vmatpush2.msra.mxu0 0.0
    %2397 = vmatprep.subr.mxu0 0.0
    %2398 = vmatpush2.msra.mxu0 0.0
    %2399 = vmatprep.subr.mxu0 0.0
    %2400 = vmatpush2.msra.mxu0 0.0
    %2401 = vmatprep.subr.mxu0 0.0
    %2402 = vmatpush2.msra.mxu0 0.0
    %2403 = vmatprep.subr.mxu0 0.0
    %2404 = vmatpush2.msra.mxu0 0.0
    %2405 = vmatprep.subr.mxu0 0.0
    %2406 = vmatpush2.msra.mxu0 0.0
    %2407 = vmatprep.subr.mxu0 0.0
    %2408 = vmatpush2.msra.mxu0 0.0
    %2409 = vmatprep.subr.mxu0 0.0
    %2410 = vmatpush2.msra.mxu0 0.0
    %2411 = vmatprep.subr.mxu0 0.0
    %2412 = vmatpush2.msra.mxu0 0.0
    %2413 = vmatprep.mubr.f32.mxu0 0.0
    %2414 = vmatmul.mubr.f32.gmra.mxu0 %v1883
    %v2415 = vpop.f32.mrf.mxu0
    %v2416 = vadd.f32 0.0, %v2415
    %v2417 = vpop.f32.mrf.mxu0
    %2418 = vmatprep.mubr.f32.mxu0 0.0
    %2419 = vmatmul.mubr.f32.gmra.mxu0 %v1884
    %v2420 = vpop.f32.mrf.mxu0
    %v2421 = vadd.f32 0.0, %v2420
    %v2422 = vpop.f32.mrf.mxu0
    %2423 = vmatprep.mubr.f32.mxu0 0.0
    %2424 = vmatmul.mubr.f32.gmra.mxu0 %v1885
    %v2425 = vpop.f32.mrf.mxu0
    %v2426 = vadd.f32 0.0, %v2425
    %v2427 = vpop.f32.mrf.mxu0
    %2428 = vmatprep.mubr.f32.mxu0 0.0
    %2429 = vmatmul.mubr.f32.gmra.mxu0 %v1886
    %v2430 = vpop.f32.mrf.mxu0
    %v2431 = vadd.f32 0.0, %v2430
    %v2432 = vpop.f32.mrf.mxu0
    %2433 = vmatprep.mubr.f32.mxu0 0.0
    %2434 = vmatmul.mubr.f32.gmra.mxu0 %v1887
    %v2435 = vpop.f32.mrf.mxu0
    %v2436 = vadd.f32 0.0, %v2435
    %v2437 = vpop.f32.mrf.mxu0
    %2438 = vmatprep.mubr.f32.mxu0 0.0
    %2439 = vmatmul.mubr.f32.gmra.mxu0 %v1888
    %v2440 = vpop.f32.mrf.mxu0
    %v2441 = vadd.f32 0.0, %v2440
    %v2442 = vpop.f32.mrf.mxu0
    %2443 = vmatprep.mubr.f32.mxu0 0.0
    %2444 = vmatmul.mubr.f32.gmra.mxu0 %v1889
    %v2445 = vpop.f32.mrf.mxu0
    %v2446 = vadd.f32 0.0, %v2445
    %v2447 = vpop.f32.mrf.mxu0
    %2448 = vmatprep.mubr.f32.mxu0 0.0
    %2449 = vmatmul.mubr.f32.gmra.mxu0 %v1890
    %v2450 = vpop.f32.mrf.mxu0
    %v2451 = vadd.f32 0.0, %v2450
    %v2452 = vpop.f32.mrf.mxu0
    %2453 = vmatprep.mubr.f32.mxu0 0.0
    %2454 = vmatmul.mubr.f32.gmra.mxu0 %v1891
    %v2455 = vpop.f32.mrf.mxu0
    %v2456 = vadd.f32 0.0, %v2455
    %v2457 = vpop.f32.mrf.mxu0
    %2458 = vmatprep.mubr.f32.mxu0 0.0
    %2459 = vmatmul.mubr.f32.gmra.mxu0 %v1892
    %v2460 = vpop.f32.mrf.mxu0
    %v2461 = vadd.f32 0.0, %v2460
    %v2462 = vpop.f32.mrf.mxu0
    %2463 = vmatprep.mubr.f32.mxu0 0.0
    %2464 = vmatmul.mubr.f32.gmra.mxu0 %v1893
    %v2465 = vpop.f32.mrf.mxu0
    %v2466 = vadd.f32 0.0, %v2465
    %v2467 = vpop.f32.mrf.mxu0
    %2468 = vmatprep.mubr.f32.mxu0 0.0
    %2469 = vmatmul.mubr.f32.gmra.mxu0 %v1894
    %v2470 = vpop.f32.mrf.mxu0
    %v2471 = vadd.f32 0.0, %v2470
    %v2472 = vpop.f32.mrf.mxu0
    %2473 = vmatprep.mubr.f32.mxu0 0.0
    %2474 = vmatmul.mubr.f32.gmra.mxu0 %v1895
    %v2475 = vpop.f32.mrf.mxu0
    %v2476 = vadd.f32 0.0, %v2475
    %v2477 = vpop.f32.mrf.mxu0
    %2478 = vmatprep.mubr.f32.mxu0 0.0
    %2479 = vmatmul.mubr.f32.gmra.mxu0 %v1896
    %v2480 = vpop.f32.mrf.mxu0
    %v2481 = vadd.f32 0.0, %v2480
    %v2482 = vpop.f32.mrf.mxu0
    %2483 = vmatprep.mubr.f32.mxu0 0.0
    %2484 = vmatmul.mubr.f32.gmra.mxu0 %v1897
    %v2485 = vpop.f32.mrf.mxu0
    %v2486 = vadd.f32 0.0, %v2485
    %v2487 = vpop.f32.mrf.mxu0
    %2488 = vmatprep.mubr.f32.mxu0 0.0
    %2489 = vmatmul.mubr.f32.gmra.mxu0 %v1898
    %v2490 = vpop.f32.mrf.mxu0
    %v2491 = vadd.f32 0.0, %v2490
    %v2492 = vpop.f32.mrf.mxu0
    %2493 = vdwg.mxu0
    %2494 = vrot.lane.b32.xlu0 %v327, 64
    %v2495 = vpop.permute.xlu0 %2494
    %2496 = vrot.lane.b32.xlu0 %v329, 64
    %v2497 = vpop.permute.xlu0 %2496
    %2498 = vrot.lane.b32.xlu0 %v331, 64
    %v2499 = vpop.permute.xlu0 %2498
    %2500 = vrot.lane.b32.xlu0 %v333, 64
    %v2501 = vpop.permute.xlu0 %2500
    %2502 = vrot.lane.b32.xlu0 %v335, 64
    %v2503 = vpop.permute.xlu0 %2502
    %2504 = vrot.lane.b32.xlu0 %v337, 64
    %v2505 = vpop.permute.xlu0 %2504
    %2506 = vrot.lane.b32.xlu0 %v339, 64
    %v2507 = vpop.permute.xlu0 %2506
    %2508 = vrot.lane.b32.xlu0 %v341, 64
    %v2509 = vpop.permute.xlu0 %2508
    %2510 = vrot.lane.b32.xlu0 %v343, 64
    %v2511 = vpop.permute.xlu0 %2510
    %2512 = vrot.lane.b32.xlu0 %v345, 64
    %v2513 = vpop.permute.xlu0 %2512
    %2514 = vrot.lane.b32.xlu0 %v347, 64
    %v2515 = vpop.permute.xlu0 %2514
    %2516 = vrot.lane.b32.xlu0 %v349, 64
    %v2517 = vpop.permute.xlu0 %2516
    %2518 = vrot.lane.b32.xlu0 %v351, 64
    %v2519 = vpop.permute.xlu0 %2518
    %2520 = vrot.lane.b32.xlu0 %v353, 64
    %v2521 = vpop.permute.xlu0 %2520
    %2522 = vrot.lane.b32.xlu0 %v355, 64
    %v2523 = vpop.permute.xlu0 %2522
    %2524 = vrot.lane.b32.xlu0 %v357, 64
    %v2525 = vpop.permute.xlu0 %2524
    %2542 = vmatprep.subr.mxu0 0.0
    %2543 = vmatpush1.msra.mxu0 %v2525
    %2544 = vmatprep.subr.mxu0 0.0
    %2545 = vmatpush1.msra.mxu0 %v2523
    %2546 = vmatprep.subr.mxu0 0.0
    %2547 = vmatpush1.msra.mxu0 %v2521
    %2548 = vmatprep.subr.mxu0 0.0
    %2549 = vmatpush1.msra.mxu0 %v2519
    %2550 = vmatprep.subr.mxu0 0.0
    %2551 = vmatpush1.msra.mxu0 %v2517
    %2552 = vmatprep.subr.mxu0 0.0
    %2553 = vmatpush1.msra.mxu0 %v2515
    %2554 = vmatprep.subr.mxu0 0.0
    %2555 = vmatpush1.msra.mxu0 %v2513
    %2556 = vmatprep.subr.mxu0 0.0
    %2557 = vmatpush1.msra.mxu0 %v2511
    %2558 = vmatprep.subr.mxu0 0.0
    %2559 = vmatpush1.msra.mxu0 %v2509
    %2560 = vmatprep.subr.mxu0 0.0
    %2561 = vmatpush1.msra.mxu0 %v2507
    %2562 = vmatprep.subr.mxu0 0.0
    %2563 = vmatpush1.msra.mxu0 %v2505
    %2564 = vmatprep.subr.mxu0 0.0
    %2565 = vmatpush1.msra.mxu0 %v2503
    %2566 = vmatprep.subr.mxu0 0.0
    %2567 = vmatpush1.msra.mxu0 %v2501
    %2568 = vmatprep.subr.mxu0 0.0
    %2569 = vmatpush1.msra.mxu0 %v2499
    %2570 = vmatprep.subr.mxu0 0.0
    %2571 = vmatpush1.msra.mxu0 %v2497
    %2572 = vmatprep.subr.mxu0 0.0
    %2573 = vmatpush1.msra.mxu0 %v2495
    %2574 = vmatprep.subr.mxu0 0.0
    %2575 = vmatpush2.msra.mxu0 0.0
    %2576 = vmatprep.subr.mxu0 0.0
    %2577 = vmatpush2.msra.mxu0 0.0
    %2578 = vmatprep.subr.mxu0 0.0
    %2579 = vmatpush2.msra.mxu0 0.0
    %2580 = vmatprep.subr.mxu0 0.0
    %2581 = vmatpush2.msra.mxu0 0.0
    %2582 = vmatprep.subr.mxu0 0.0
    %2583 = vmatpush2.msra.mxu0 0.0
    %2584 = vmatprep.subr.mxu0 0.0
    %2585 = vmatpush2.msra.mxu0 0.0
    %2586 = vmatprep.subr.mxu0 0.0
    %2587 = vmatpush2.msra.mxu0 0.0
    %2588 = vmatprep.subr.mxu0 0.0
    %2589 = vmatpush2.msra.mxu0 0.0
    %2590 = vmatprep.subr.mxu0 0.0
    %2591 = vmatpush2.msra.mxu0 0.0
    %2592 = vmatprep.subr.mxu0 0.0
    %2593 = vmatpush2.msra.mxu0 0.0
    %2594 = vmatprep.subr.mxu0 0.0
    %2595 = vmatpush2.msra.mxu0 0.0
    %2596 = vmatprep.subr.mxu0 0.0
    %2597 = vmatpush2.msra.mxu0 0.0
    %2598 = vmatprep.subr.mxu0 0.0
    %2599 = vmatpush2.msra.mxu0 0.0
    %2600 = vmatprep.subr.mxu0 0.0
    %2601 = vmatpush2.msra.mxu0 0.0
    %2602 = vmatprep.subr.mxu0 0.0
    %2603 = vmatpush2.msra.mxu0 0.0
    %2604 = vmatprep.subr.mxu0 0.0
    %2605 = vmatpush2.msra.mxu0 0.0
    %2606 = vmatprep.mubr.f32.mxu0 0.0
    %2607 = vmatmul.mubr.f32.gmra.mxu0 %v1899
    %v2608 = vpop.f32.mrf.mxu0
    %v2609 = vadd.f32 0.0, %v2608
    %v2610 = vpop.f32.mrf.mxu0
    %2611 = vmatprep.mubr.f32.mxu0 0.0
    %2612 = vmatmul.mubr.f32.gmra.mxu0 %v1900
    %v2613 = vpop.f32.mrf.mxu0
    %v2614 = vadd.f32 0.0, %v2613
    %v2615 = vpop.f32.mrf.mxu0
    %2616 = vmatprep.mubr.f32.mxu0 0.0
    %2617 = vmatmul.mubr.f32.gmra.mxu0 %v1901
    %v2618 = vpop.f32.mrf.mxu0
    %v2619 = vadd.f32 0.0, %v2618
    %v2620 = vpop.f32.mrf.mxu0
    %2621 = vmatprep.mubr.f32.mxu0 0.0
    %2622 = vmatmul.mubr.f32.gmra.mxu0 %v1902
    %v2623 = vpop.f32.mrf.mxu0
    %v2624 = vadd.f32 0.0, %v2623
    %v2625 = vpop.f32.mrf.mxu0
    %2626 = vmatprep.mubr.f32.mxu0 0.0
    %2627 = vmatmul.mubr.f32.gmra.mxu0 %v1903
    %v2628 = vpop.f32.mrf.mxu0
    %v2629 = vadd.f32 0.0, %v2628
    %v2630 = vpop.f32.mrf.mxu0
    %2631 = vmatprep.mubr.f32.mxu0 0.0
    %2632 = vmatmul.mubr.f32.gmra.mxu0 %v1904
    %v2633 = vpop.f32.mrf.mxu0
    %v2634 = vadd.f32 0.0, %v2633
    %v2635 = vpop.f32.mrf.mxu0
    %2636 = vmatprep.mubr.f32.mxu0 0.0
    %2637 = vmatmul.mubr.f32.gmra.mxu0 %v1905
    %v2638 = vpop.f32.mrf.mxu0
    %v2639 = vadd.f32 0.0, %v2638
    %v2640 = vpop.f32.mrf.mxu0
    %2641 = vmatprep.mubr.f32.mxu0 0.0
    %2642 = vmatmul.mubr.f32.gmra.mxu0 %v1906
    %v2643 = vpop.f32.mrf.mxu0
    %v2644 = vadd.f32 0.0, %v2643
    %v2645 = vpop.f32.mrf.mxu0
    %2646 = vmatprep.mubr.f32.mxu0 0.0
    %2647 = vmatmul.mubr.f32.gmra.mxu0 %v1907
    %v2648 = vpop.f32.mrf.mxu0
    %v2649 = vadd.f32 0.0, %v2648
    %v2650 = vpop.f32.mrf.mxu0
    %2651 = vmatprep.mubr.f32.mxu0 0.0
    %2652 = vmatmul.mubr.f32.gmra.mxu0 %v1908
    %v2653 = vpop.f32.mrf.mxu0
    %v2654 = vadd.f32 0.0, %v2653
    %v2655 = vpop.f32.mrf.mxu0
    %2656 = vmatprep.mubr.f32.mxu0 0.0
    %2657 = vmatmul.mubr.f32.gmra.mxu0 %v1909
    %v2658 = vpop.f32.mrf.mxu0
    %v2659 = vadd.f32 0.0, %v2658
    %v2660 = vpop.f32.mrf.mxu0
    %2661 = vmatprep.mubr.f32.mxu0 0.0
    %2662 = vmatmul.mubr.f32.gmra.mxu0 %v1910
    %v2663 = vpop.f32.mrf.mxu0
    %v2664 = vadd.f32 0.0, %v2663
    %v2665 = vpop.f32.mrf.mxu0
    %2666 = vmatprep.mubr.f32.mxu0 0.0
    %2667 = vmatmul.mubr.f32.gmra.mxu0 %v1911
    %v2668 = vpop.f32.mrf.mxu0
    %v2669 = vadd.f32 0.0, %v2668
    %v2670 = vpop.f32.mrf.mxu0
    %2671 = vmatprep.mubr.f32.mxu0 0.0
    %2672 = vmatmul.mubr.f32.gmra.mxu0 %v1912
    %v2673 = vpop.f32.mrf.mxu0
    %v2674 = vadd.f32 0.0, %v2673
    %v2675 = vpop.f32.mrf.mxu0
    %2676 = vmatprep.mubr.f32.mxu0 0.0
    %2677 = vmatmul.mubr.f32.gmra.mxu0 %v1913
    %v2678 = vpop.f32.mrf.mxu0
    %v2679 = vadd.f32 0.0, %v2678
    %v2680 = vpop.f32.mrf.mxu0
    %2681 = vmatprep.mubr.f32.mxu0 0.0
    %2682 = vmatmul.mubr.f32.gmra.mxu0 %v1914
    %v2683 = vpop.f32.mrf.mxu0
    %v2684 = vadd.f32 0.0, %v2683
    %v2685 = vpop.f32.mrf.mxu0
    %2686 = vdwg.mxu0
    %2703 = vrot.lane.b32.xlu0 %v2223, 8
    %v2704 = vpop.permute.xlu0 %2703
    %2705 = vrot.lane.b32.xlu0 %v2228, 8
    %v2706 = vpop.permute.xlu0 %2705
    %2707 = vrot.lane.b32.xlu0 %v2233, 8
    %v2708 = vpop.permute.xlu0 %2707
    %2709 = vrot.lane.b32.xlu0 %v2238, 8
    %v2710 = vpop.permute.xlu0 %2709
    %2711 = vrot.lane.b32.xlu0 %v2243, 8
    %v2712 = vpop.permute.xlu0 %2711
    %2713 = vrot.lane.b32.xlu0 %v2248, 8
    %v2714 = vpop.permute.xlu0 %2713
    %2715 = vrot.lane.b32.xlu0 %v2253, 8
    %v2716 = vpop.permute.xlu0 %2715
    %2717 = vrot.lane.b32.xlu0 %v2258, 8
    %v2718 = vpop.permute.xlu0 %2717
    %2719 = vrot.lane.b32.xlu0 %v2263, 8
    %v2720 = vpop.permute.xlu0 %2719
    %2721 = vrot.lane.b32.xlu0 %v2268, 8
    %v2722 = vpop.permute.xlu0 %2721
    %2723 = vrot.lane.b32.xlu0 %v2273, 8
    %v2724 = vpop.permute.xlu0 %2723
    %2725 = vrot.lane.b32.xlu0 %v2278, 8
    %v2726 = vpop.permute.xlu0 %2725
    %2727 = vrot.lane.b32.xlu0 %v2283, 8
    %v2728 = vpop.permute.xlu0 %2727
    %2729 = vrot.lane.b32.xlu0 %v2288, 8
    %v2730 = vpop.permute.xlu0 %2729
    %2731 = vrot.lane.b32.xlu0 %v2293, 8
    %v2732 = vpop.permute.xlu0 %2731
    %2733 = vrot.lane.b32.xlu0 %v2298, 8
    %v2734 = vpop.permute.xlu0 %2733
    %2767 = vrot.lane.b32.xlu0 %v2416, 16
    %v2768 = vpop.permute.xlu0 %2767
    %2769 = vrot.lane.b32.xlu0 %v2421, 16
    %v2770 = vpop.permute.xlu0 %2769
    %2771 = vrot.lane.b32.xlu0 %v2426, 16
    %v2772 = vpop.permute.xlu0 %2771
    %2773 = vrot.lane.b32.xlu0 %v2431, 16
    %v2774 = vpop.permute.xlu0 %2773
    %2775 = vrot.lane.b32.xlu0 %v2436, 16
    %v2776 = vpop.permute.xlu0 %2775
    %2777 = vrot.lane.b32.xlu0 %v2441, 16
    %v2778 = vpop.permute.xlu0 %2777
    %2779 = vrot.lane.b32.xlu0 %v2446, 16
    %v2780 = vpop.permute.xlu0 %2779
    %2781 = vrot.lane.b32.xlu0 %v2451, 16
    %v2782 = vpop.permute.xlu0 %2781
    %2783 = vrot.lane.b32.xlu0 %v2456, 16
    %v2784 = vpop.permute.xlu0 %2783
    %2785 = vrot.lane.b32.xlu0 %v2461, 16
    %v2786 = vpop.permute.xlu0 %2785
    %2787 = vrot.lane.b32.xlu0 %v2466, 16
    %v2788 = vpop.permute.xlu0 %2787
    %2789 = vrot.lane.b32.xlu0 %v2471, 16
    %v2790 = vpop.permute.xlu0 %2789
    %2791 = vrot.lane.b32.xlu0 %v2476, 16
    %v2792 = vpop.permute.xlu0 %2791
    %2793 = vrot.lane.b32.xlu0 %v2481, 16
    %v2794 = vpop.permute.xlu0 %2793
    %2795 = vrot.lane.b32.xlu0 %v2486, 16
    %v2796 = vpop.permute.xlu0 %2795
    %2797 = vrot.lane.b32.xlu0 %v2491, 16
    %v2798 = vpop.permute.xlu0 %2797
    %2831 = vrot.lane.b32.xlu0 %v2609, 24
    %v2832 = vpop.permute.xlu0 %2831
    %2833 = vrot.lane.b32.xlu0 %v2614, 24
    %v2834 = vpop.permute.xlu0 %2833
    %2835 = vrot.lane.b32.xlu0 %v2619, 24
    %v2836 = vpop.permute.xlu0 %2835
    %2837 = vrot.lane.b32.xlu0 %v2624, 24
    %v2838 = vpop.permute.xlu0 %2837
    %2839 = vrot.lane.b32.xlu0 %v2629, 24
    %v2840 = vpop.permute.xlu0 %2839
    %2841 = vrot.lane.b32.xlu0 %v2634, 24
    %v2842 = vpop.permute.xlu0 %2841
    %2843 = vrot.lane.b32.xlu0 %v2639, 24
    %v2844 = vpop.permute.xlu0 %2843
    %2845 = vrot.lane.b32.xlu0 %v2644, 24
    %v2846 = vpop.permute.xlu0 %2845
    %2847 = vrot.lane.b32.xlu0 %v2649, 24
    %v2848 = vpop.permute.xlu0 %2847
    %2849 = vrot.lane.b32.xlu0 %v2654, 24
    %v2850 = vpop.permute.xlu0 %2849
    %2851 = vrot.lane.b32.xlu0 %v2659, 24
    %v2852 = vpop.permute.xlu0 %2851
    %2853 = vrot.lane.b32.xlu0 %v2664, 24
    %v2854 = vpop.permute.xlu0 %2853
    %2855 = vrot.lane.b32.xlu0 %v2669, 24
    %v2856 = vpop.permute.xlu0 %2855
    %2857 = vrot.lane.b32.xlu0 %v2674, 24
    %v2858 = vpop.permute.xlu0 %2857
    %2859 = vrot.lane.b32.xlu0 %v2679, 24
    %v2860 = vpop.permute.xlu0 %2859
    %2861 = vrot.lane.b32.xlu0 %v2684, 24
    %v2862 = vpop.permute.xlu0 %2861
    %v2879 = vsel %vm406, %v2030, %v2704
    %v2880 = vsel %vm406, %v2035, %v2706
    %v2881 = vsel %vm406, %v2040, %v2708
    %v2882 = vsel %vm406, %v2045, %v2710
    %v2883 = vsel %vm406, %v2050, %v2712
    %v2884 = vsel %vm406, %v2055, %v2714
    %v2885 = vsel %vm406, %v2060, %v2716
    %v2886 = vsel %vm406, %v2065, %v2718
    %v2887 = vsel %vm406, %v2070, %v2720
    %v2888 = vsel %vm406, %v2075, %v2722
    %v2889 = vsel %vm406, %v2080, %v2724
    %v2890 = vsel %vm406, %v2085, %v2726
    %v2891 = vsel %vm406, %v2090, %v2728
    %v2892 = vsel %vm406, %v2095, %v2730
    %v2893 = vsel %vm406, %v2100, %v2732
    %v2894 = vsel %vm406, %v2105, %v2734
    %vm2895 = vcmask 130048
    %v2896 = vsel %vm2895, %v2879, %v2768
    %v2897 = vsel %vm2895, %v2880, %v2770
    %v2898 = vsel %vm2895, %v2881, %v2772
    %v2899 = vsel %vm2895, %v2882, %v2774
    %v2900 = vsel %vm2895, %v2883, %v2776
    %v2901 = vsel %vm2895, %v2884, %v2778
    %v2902 = vsel %vm2895, %v2885, %v2780
    %v2903 = vsel %vm2895, %v2886, %v2782
    %v2904 = vsel %vm2895, %v2887, %v2784
    %v2905 = vsel %vm2895, %v2888, %v2786
    %v2906 = vsel %vm2895, %v2889, %v2788
    %v2907 = vsel %vm2895, %v2890, %v2790
    %v2908 = vsel %vm2895, %v2891, %v2792
    %v2909 = vsel %vm2895, %v2892, %v2794
    %v2910 = vsel %vm2895, %v2893, %v2796
    %v2911 = vsel %vm2895, %v2894, %v2798
    %vm2912 = vcmask 195584
    %v2913 = vsel %vm2912, %v2896, %v2832
    %v2914 = vsel %vm2912, %v2897, %v2834
    %v2915 = vsel %vm2912, %v2898, %v2836
    %v2916 = vsel %vm2912, %v2899, %v2838
    %v2917 = vsel %vm2912, %v2900, %v2840
    %v2918 = vsel %vm2912, %v2901, %v2842
    %v2919 = vsel %vm2912, %v2902, %v2844
    %v2920 = vsel %vm2912, %v2903, %v2846
    %v2921 = vsel %vm2912, %v2904, %v2848
    %v2922 = vsel %vm2912, %v2905, %v2850
    %v2923 = vsel %vm2912, %v2906, %v2852
    %v2924 = vsel %vm2912, %v2907, %v2854
    %v2925 = vsel %vm2912, %v2908, %v2856
    %v2926 = vsel %vm2912, %v2909, %v2858
    %v2927 = vsel %vm2912, %v2910, %v2860
    %v2928 = vsel %vm2912, %v2911, %v2862
    %v2929 = vld [vmem:[%s3] sm:$0xff]
    %v2930 = vld [vmem:[%s3 + $0x8] sm:$0xff]
    %v2931 = vld [vmem:[%s3 + $0x10] sm:$0xff]
    %v2932 = vld [vmem:[%s3 + $0x18] sm:$0xff]
    %v2933 = vld [vmem:[%s3 + $0x20] sm:$0x1]
    %v2934 = vlaneseq
    %v2935 = vshrl.u32 %v2934, 7
    %v2936 = vsub.s32 0, %v2935
    %v2937 = vrot.slane %v2933, %v2936
    %v2939 = vsel %vm52, %v2913, 0
    %v2942 = vsel %vm52, %v2914, 0
    %v2945 = vsel %vm52, %v2915, 0
    %v2948 = vsel %vm52, %v2916, 0
    %v2951 = vsel %vm52, %v2917, 0
    %v2954 = vsel %vm52, %v2918, 0
    %v2957 = vsel %vm52, %v2919, 0
    %v2960 = vsel %vm52, %v2920, 0
    %v2963 = vsel %vm52, %v2921, 0
    %v2966 = vsel %vm52, %v2922, 0
    %v2969 = vsel %vm52, %v2923, 0
    %v2972 = vsel %vm52, %v2924, 0
    %v2975 = vsel %vm52, %v2925, 0
    %v2978 = vsel %vm52, %v2926, 0
    %v2981 = vsel %vm52, %v2927, 0
    %v2984 = vsel %vm52, %v2928, 0
    %2986 = vmatprep.subr.mxu0 0.0
    %2987 = vmatpush1.msra.mxu0 0.0
    %2988 = vmatprep.subr.mxu0 0.0
    %2989 = vmatpush1.msra.mxu0 0.0
    %2990 = vmatprep.subr.mxu0 0.0
    %2991 = vmatpush1.msra.mxu0 0.0
    %2992 = vmatprep.subr.mxu0 0.0
    %2993 = vmatpush1.msra.mxu0 0.0
    %2994 = vmatprep.subr.mxu0 0.0
    %2995 = vmatpush1.msra.mxu0 0.0
    %2996 = vmatprep.subr.mxu0 0.0
    %2997 = vmatpush1.msra.mxu0 0.0
    %2998 = vmatprep.subr.mxu0 0.0
    %2999 = vmatpush1.msra.mxu0 0.0
    %3000 = vmatprep.subr.mxu0 0.0
    %3001 = vmatpush1.msra.mxu0 0.0
    %3002 = vmatprep.subr.mxu0 0.0
    %3003 = vmatpush1.msra.mxu0 0.0
    %3004 = vmatprep.subr.mxu0 0.0
    %3005 = vmatpush1.msra.mxu0 0.0
    %3006 = vmatprep.subr.mxu0 0.0
    %3007 = vmatpush1.msra.mxu0 0.0
    %3008 = vmatprep.subr.mxu0 0.0
    %3009 = vmatpush1.msra.mxu0 0.0
    %3010 = vmatprep.subr.mxu0 0.0
    %3011 = vmatpush1.msra.mxu0 %v2932
    %3012 = vmatprep.subr.mxu0 0.0
    %3013 = vmatpush1.msra.mxu0 %v2931
    %3014 = vmatprep.subr.mxu0 0.0
    %3015 = vmatpush1.msra.mxu0 %v2930
    %3016 = vmatprep.subr.mxu0 0.0
    %3017 = vmatpush1.msra.mxu0 %v2929
    %3018 = vmatprep.subr.mxu0 0.0
    %3019 = vmatpush2.msra.mxu0 0.0
    %3020 = vmatprep.subr.mxu0 0.0
    %3021 = vmatpush2.msra.mxu0 0.0
    %3022 = vmatprep.subr.mxu0 0.0
    %3023 = vmatpush2.msra.mxu0 0.0
    %3024 = vmatprep.subr.mxu0 0.0
    %3025 = vmatpush2.msra.mxu0 0.0
    %3026 = vmatprep.subr.mxu0 0.0
    %3027 = vmatpush2.msra.mxu0 0.0
    %3028 = vmatprep.subr.mxu0 0.0
    %3029 = vmatpush2.msra.mxu0 0.0
    %3030 = vmatprep.subr.mxu0 0.0
    %3031 = vmatpush2.msra.mxu0 0.0
    %3032 = vmatprep.subr.mxu0 0.0
    %3033 = vmatpush2.msra.mxu0 0.0
    %3034 = vmatprep.subr.mxu0 0.0
    %3035 = vmatpush2.msra.mxu0 0.0
    %3036 = vmatprep.subr.mxu0 0.0
    %3037 = vmatpush2.msra.mxu0 0.0
    %3038 = vmatprep.subr.mxu0 0.0
    %3039 = vmatpush2.msra.mxu0 0.0
    %3040 = vmatprep.subr.mxu0 0.0
    %3041 = vmatpush2.msra.mxu0 0.0
    %3042 = vmatprep.subr.mxu0 0.0
    %3043 = vmatpush2.msra.mxu0 0.0
    %3044 = vmatprep.subr.mxu0 0.0
    %3045 = vmatpush2.msra.mxu0 0.0
    %3046 = vmatprep.subr.mxu0 0.0
    %3047 = vmatpush2.msra.mxu0 0.0
    %3048 = vmatprep.subr.mxu0 0.0
    %3049 = vmatpush2.msra.mxu0 0.0
    %3050 = vmatprep.mubr.f32.mxu0 0.0
    %3051 = vmatmul.mubr.f32.gmra.mxu0 %v2939
    %v3052 = vpop.f32.mrf.mxu0
    %v3053 = vadd.f32 %v2937, %v3052
    %v3054 = vpop.f32.mrf.mxu0
    %3055 = vmatprep.mubr.f32.mxu0 0.0
    %3056 = vmatmul.mubr.f32.gmra.mxu0 %v2942
    %v3057 = vpop.f32.mrf.mxu0
    %v3058 = vadd.f32 %v2937, %v3057
    %v3059 = vpop.f32.mrf.mxu0
    %3060 = vmatprep.mubr.f32.mxu0 0.0
    %3061 = vmatmul.mubr.f32.gmra.mxu0 %v2945
    %v3062 = vpop.f32.mrf.mxu0
    %v3063 = vadd.f32 %v2937, %v3062
    %v3064 = vpop.f32.mrf.mxu0
    %3065 = vmatprep.mubr.f32.mxu0 0.0
    %3066 = vmatmul.mubr.f32.gmra.mxu0 %v2948
    %v3067 = vpop.f32.mrf.mxu0
    %v3068 = vadd.f32 %v2937, %v3067
    %v3069 = vpop.f32.mrf.mxu0
    %3070 = vmatprep.mubr.f32.mxu0 0.0
    %3071 = vmatmul.mubr.f32.gmra.mxu0 %v2951
    %v3072 = vpop.f32.mrf.mxu0
    %v3073 = vadd.f32 %v2937, %v3072
    %v3074 = vpop.f32.mrf.mxu0
    %3075 = vmatprep.mubr.f32.mxu0 0.0
    %3076 = vmatmul.mubr.f32.gmra.mxu0 %v2954
    %v3077 = vpop.f32.mrf.mxu0
    %v3078 = vadd.f32 %v2937, %v3077
    %v3079 = vpop.f32.mrf.mxu0
    %3080 = vmatprep.mubr.f32.mxu0 0.0
    %3081 = vmatmul.mubr.f32.gmra.mxu0 %v2957
    %v3082 = vpop.f32.mrf.mxu0
    %v3083 = vadd.f32 %v2937, %v3082
    %v3084 = vpop.f32.mrf.mxu0
    %3085 = vmatprep.mubr.f32.mxu0 0.0
    %3086 = vmatmul.mubr.f32.gmra.mxu0 %v2960
    %v3087 = vpop.f32.mrf.mxu0
    %v3088 = vadd.f32 %v2937, %v3087
    %v3089 = vpop.f32.mrf.mxu0
    %3090 = vmatprep.mubr.f32.mxu0 0.0
    %3091 = vmatmul.mubr.f32.gmra.mxu0 %v2963
    %v3092 = vpop.f32.mrf.mxu0
    %v3093 = vadd.f32 %v2937, %v3092
    %v3094 = vpop.f32.mrf.mxu0
    %3095 = vmatprep.mubr.f32.mxu0 0.0
    %3096 = vmatmul.mubr.f32.gmra.mxu0 %v2966
    %v3097 = vpop.f32.mrf.mxu0
    %v3098 = vadd.f32 %v2937, %v3097
    %v3099 = vpop.f32.mrf.mxu0
    %3100 = vmatprep.mubr.f32.mxu0 0.0
    %3101 = vmatmul.mubr.f32.gmra.mxu0 %v2969
    %v3102 = vpop.f32.mrf.mxu0
    %v3103 = vadd.f32 %v2937, %v3102
    %v3104 = vpop.f32.mrf.mxu0
    %3105 = vmatprep.mubr.f32.mxu0 0.0
    %3106 = vmatmul.mubr.f32.gmra.mxu0 %v2972
    %v3107 = vpop.f32.mrf.mxu0
    %v3108 = vadd.f32 %v2937, %v3107
    %v3109 = vpop.f32.mrf.mxu0
    %3110 = vmatprep.mubr.f32.mxu0 0.0
    %3111 = vmatmul.mubr.f32.gmra.mxu0 %v2975
    %v3112 = vpop.f32.mrf.mxu0
    %v3113 = vadd.f32 %v2937, %v3112
    %v3114 = vpop.f32.mrf.mxu0
    %3115 = vmatprep.mubr.f32.mxu0 0.0
    %3116 = vmatmul.mubr.f32.gmra.mxu0 %v2978
    %v3117 = vpop.f32.mrf.mxu0
    %v3118 = vadd.f32 %v2937, %v3117
    %v3119 = vpop.f32.mrf.mxu0
    %3120 = vmatprep.mubr.f32.mxu0 0.0
    %3121 = vmatmul.mubr.f32.gmra.mxu0 %v2981
    %v3122 = vpop.f32.mrf.mxu0
    %v3123 = vadd.f32 %v2937, %v3122
    %v3124 = vpop.f32.mrf.mxu0
    %3125 = vmatprep.mubr.f32.mxu0 0.0
    %3126 = vmatmul.mubr.f32.gmra.mxu0 %v2984
    %v3127 = vpop.f32.mrf.mxu0
    %v3128 = vadd.f32 %v2937, %v3127
    %v3129 = vpop.f32.mrf.mxu0
    %3130 = vdwg.mxu0
    %3131 = vst [vmem:[#allocation5] sm:$0xff] %v3053
    %3132 = vst [vmem:[#allocation5 + $0x8] sm:$0xff] %v3058
    %3133 = vst [vmem:[#allocation5 + $0x10] sm:$0xff] %v3063
    %3134 = vst [vmem:[#allocation5 + $0x18] sm:$0xff] %v3068
    %3135 = vst [vmem:[#allocation5 + $0x20] sm:$0xff] %v3073
    %3136 = vst [vmem:[#allocation5 + $0x28] sm:$0xff] %v3078
    %3137 = vst [vmem:[#allocation5 + $0x30] sm:$0xff] %v3083
    %3138 = vst [vmem:[#allocation5 + $0x38] sm:$0xff] %v3088
    %3139 = vst [vmem:[#allocation5 + $0x40] sm:$0xff] %v3093
    %3140 = vst [vmem:[#allocation5 + $0x48] sm:$0xff] %v3098
    %3141 = vst [vmem:[#allocation5 + $0x50] sm:$0xff] %v3103
    %3142 = vst [vmem:[#allocation5 + $0x58] sm:$0xff] %v3108
    %3143 = vst [vmem:[#allocation5 + $0x60] sm:$0xff] %v3113
    %3144 = vst [vmem:[#allocation5 + $0x68] sm:$0xff] %v3118
    %3145 = vst [vmem:[#allocation5 + $0x70] sm:$0xff] %v3123
    %3146 = vst [vmem:[#allocation5 + $0x78] sm:$0xff] %v3128
    // Predicated region
    $region22: #{tpu_custom_call.1} parent=1 // pred_check
      _
    $region23: #{tpu_custom_call.1} parent=1 // pred_check_branch
      %3148 = sbr.rel (0) target = $region25
    $region24: #{tpu_custom_call.1} parent=1 // pred_region
      %s3150 = ssub.s32 2048, 2048
      %3151 = vsyncadd [#allocation4], %s3150
      %s3152 = sshll.u32 [#allocation5], 4
      %s3153 = int_to_ptr.vmem [resolvable:$true] %s3152
      %3158 = dma.vmem_to_hbm [thread:$0]  %s3153, 2048, %s4, [#allocation4], 128, 128, 8
    $region25: #{tpu_custom_call.1} parent=1 // pred_fallthru
      _
    // Predicated region
    $region26: #{tpu_custom_call.1} parent=1 // pred_check
      _
    $region27: #{tpu_custom_call.1} parent=1 // pred_check_branch
      %3160 = sbr.rel (0) target = $region29
    $region28: #{tpu_custom_call.1} parent=1 // pred_region
      %3161 = dma.done [#allocation4], 2048
    $region29: #{tpu_custom_call.1} parent=1 // pred_fallthru
      _
    %3162 = vsyncpa [#allocation3], 1
    %3163 = vsyncpa [#allocation4], 1

</llo_original>
